<compile_context>
chip_gen: v5e
topology: v5e:2x2
jax: 0.10.0
libtpu: 0.0.40
codegen_flags: <defaults>
</compile_context>

<pallas_src>
import numpy as np
import jax
import jax.numpy as jnp
from jax.experimental import pallas as pl
from jax.experimental.pallas import tpu as pltpu

LEAKY_SLOPE = 0.2
HALO = 8  # 8 fused ResConv layers -> 8-row halo


# --------------------------------------------------------------------------
# Hardware-aware VMEM budgeting
# --------------------------------------------------------------------------
def _vmem_limit_bytes():
    phys = 64 * 1024 * 1024            # conservative fallback (v7x per-core VMEM)
    try:
        info = pltpu.get_tpu_info()
        cap = getattr(info, "vmem_capacity_bytes", None)
        if cap:
            phys = int(cap)
    except Exception:
        pass
    # leave headroom for Mosaic internal scratch / double-buffered BlockSpec DMAs
    return max(32 * 1024 * 1024, phys - 16 * 1024 * 1024)


VMEM_LIMIT = _vmem_limit_bytes()
_VMEM_BUDGET = VMEM_LIMIT // 2         # share modelled by the tile planners


def _round_up(x, m):
    return (x + m - 1) // m * m


def _pad2d_bytes(rows, cols, dtype):
    """VMEM footprint of a (rows, cols) tile after lane/sublane padding."""
    it = np.dtype(dtype).itemsize
    sub = 8 * max(4 // it, 1)          # 8 sublanes for f32, 16 for bf16
    return _round_up(max(rows, 1), sub) * _round_up(max(cols, 1), 128) * it


def _cparams():
    return pltpu.CompilerParams(
        dimension_semantics=("parallel", "parallel"),   # grid = (batch, row tile)
        vmem_limit_bytes=int(VMEM_LIMIT))


def _leaky(x):
    return jnp.where(x >= 0, x, LEAKY_SLOPE * x)


# --------------------------------------------------------------------------
# pltpu.roll probe: verify lowering + sign convention for sublane rolls on a
# shape matching the convblock use; fall back to slice-based taps otherwise.
# --------------------------------------------------------------------------
_ROLL = {"checked": False, "ok": False, "np_convention": True}


def _roll_setup():
    if _ROLL["checked"]:
        return
    _ROLL["checked"] = True
    try:
        def k(x_ref, o_ref):
            o_ref[...] = pltpu.roll(x_ref[...], shift=1, axis=1)

        x = jnp.broadcast_to(
            jnp.arange(18, dtype=jnp.float32)[None, :, None], (4, 18, 64))
        y = jax.block_until_ready(
            pl.pallas_call(
                k, out_shape=jax.ShapeDtypeStruct((4, 18, 64), jnp.float32))(x))
        v = float(y[0, 0, 0])
        if v == 17.0:                  # out[j] = in[(j - shift) % n]   (np.roll)
            _ROLL.update(ok=True, np_convention=True)
        elif v == 1.0:                 # out[j] = in[(j + shift) % n]
            _ROLL.update(ok=True, np_convention=False)
    except Exception:
        _ROLL["ok"] = False


def _roll_shift_static(delta, n, np_conv):
    """Static shift s.t. rolled[j] == original[(j + delta) % n]."""
    return (-delta) % n if np_conv else delta % n


# --------------------------------------------------------------------------
# Kernel 1: 3x3 conv, stride 2, padding 1, + LeakyReLU(0.2)
# Glue: zero-pad + space-to-depth (pure permutation), bf16.  Kernel: fold the
# 4 shifted s2d windows into K -> ONE MXU matmul per tile with K = 16*Cin.
# --------------------------------------------------------------------------
def _space_to_depth2(xp):
    B, Hp, Wp, C = xp.shape
    xs = xp.reshape(B, Hp // 2, 2, Wp // 2, 2, C)
    xs = xs.transpose(0, 1, 3, 2, 4, 5)
    return xs.reshape(B, Hp // 2, Wp // 2, 4 * C)


def _conv0_kernel(main_ref, halo_ref, w_ref, b_ref, o_ref):
    _, TH, Wo, Cout = o_ref.shape
    # TODO(synk): the axis-0 concat of main+halo costs one extra full-tile
    # copy per step in a memory-bound kernel; a scratch-assembled window or a
    # separate last-row path would remove it.
    rows = jnp.concatenate([main_ref[0], halo_ref[0]], axis=0)     # (TH+1, Ws, 4Cin) bf16
    taps = [rows[ty:ty + TH, tx:tx + Wo, :] for ty in (0, 1) for tx in (0, 1)]
    patch = jnp.concatenate(taps, axis=-1)                          # (TH, Wo, 16Cin) bf16
    acc = jnp.dot(patch.reshape(TH * Wo, patch.shape[-1]), w_ref[...],
                  preferred_element_type=jnp.float32)
    acc = _leaky(acc + b_ref[...])
    o_ref[0] = acc.reshape(TH, Wo, Cout).astype(o_ref.dtype)


def _conv0_tile(Ho, Wo, Cin, Cout, cap):
    Ws = Wo + 1
    per_row = (3 * _pad2d_bytes(Ws, 4 * Cin, jnp.bfloat16)      # main x2 + concat temp
               + 2 * _pad2d_bytes(Wo, Cout, jnp.bfloat16)       # out x2
               + _pad2d_bytes(Wo, 16 * Cin, jnp.bfloat16)       # patch temp
               + _pad2d_bytes(Wo, Cout, jnp.float32))           # f32 acc temp
    fixed = 2 * _pad2d_bytes(16 * Cin, Cout, jnp.bfloat16) + (1 << 20)
    th = max(1, int((_VMEM_BUDGET - fixed) // per_row))
    th = min(th, Ho)
    if cap:
        th = max(1, min(th, cap))
    return th


def conv3x3_s2_lrelu(x, w16, b, tile_cap=None):
    """x: (B, H, W, Cin) NHWC -> (B, H/2, W/2, Cout) bf16."""
    B, H, W, Cin = x.shape
    assert H % 2 == 0 and W % 2 == 0
    Cout = w16.shape[-1]
    Ho, Wo = H // 2, W // 2
    Ws = Wo + 1
    # TODO(synk): fold this pad + space-to-depth into the producer's out_spec
    # (extra HBM round trip before a memory-bound stage).
    xp = jnp.pad(x, ((0, 0), (1, 1), (1, 1), (0, 0)))
    s2d = _space_to_depth2(xp).astype(jnp.bfloat16)                 # (B, Ho+1, Ws, 4Cin)
    TH = _conv0_tile(Ho, Wo, Cin, Cout, tile_cap)
    nT = pl.cdiv(Ho, TH)
    Hp = nT * TH
    if Hp > Ho:
        s2d = jnp.pad(s2d, ((0, 0), (0, Hp - Ho), (0, 0), (0, 0)))
    cost = pl.CostEstimate(
        flops=2 * B * Hp * Wo * 16 * Cin * Cout,
        transcendentals=0,
        bytes_accessed=int(s2d.size * 2 + B * Hp * Wo * Cout * 2 + w16.size * 2))
    out = pl.pallas_call(
        _conv0_kernel,
        out_shape=jax.ShapeDtypeStruct((B, Hp, Wo, Cout), jnp.bfloat16),
        grid=(B, nT),
        in_specs=[
            pl.BlockSpec((1, TH, Ws, 4 * Cin), lambda bi, t: (bi, t, 0, 0)),
            pl.BlockSpec((1, 1, Ws, 4 * Cin), lambda bi, t: (bi, (t + 1) * TH, 0, 0)),
            pl.BlockSpec((16 * Cin, Cout), lambda bi, t: (0, 0)),
            pl.BlockSpec((1, Cout), lambda bi, t: (0, 0)),
        ],
        out_specs=pl.BlockSpec((1, TH, Wo, Cout), lambda bi, t: (bi, t, 0, 0)),
        compiler_params=_cparams(),
        cost_estimate=cost,
    )(s2d, s2d, w16, b)
    return out[:, :Ho] if Hp > Ho else out


# --------------------------------------------------------------------------
# Kernel 2: convblock = 8 x ResConv(c), fused, row-tiled with an 8-row halo.
#   ResConv(x) = LeakyReLU( Conv3x3_s1_p1(x) * beta + x )
# One K=9C matmul per layer; dx taps via pltpu.roll; a row-validity mask
# emulates zero padding at the true image top/bottom and at the rows padding
# H up to a multiple of TH.
# --------------------------------------------------------------------------
def _convblock_plan(H, W, C, L, cap):
    act_row = _pad2d_bytes(W, C, jnp.bfloat16)
    padf_row = _pad2d_bytes(W + 2, C, jnp.float32)
    padb_row = _pad2d_bytes(W + 2, C, jnp.bfloat16)
    patch_row = _pad2d_bytes(W, 9 * C, jnp.bfloat16)
    acc_row = _pad2d_bytes(W, C, jnp.float32)
    work_row = 4 * padf_row + 3 * padb_row + patch_row + 2 * acc_row
    blk_row = 4 * act_row                               # main in x2 + out x2
    fixed = 2 * L * _pad2d_bytes(9 * C, C, jnp.bfloat16) + (2 << 20)

    def fits(th, halo):
        return (fixed + 8 * halo * act_row + th * blk_row
                + (th + 2 * halo + 2) * work_row) <= _VMEM_BUDGET

    if (cap is None or H <= cap) and fits(H, 0):
        return H, 0                                     # single tile, no halo
    limit = min(cap, H) if cap else H
    th = 8
    while th + 8 <= limit and fits(th + 8, HALO):
        th += 8
    return th, HALO


def _make_convblock_kernel(TH, W, C, L, H_true, halo, use_roll, np_conv):
    HB = TH + 2 * halo          # activation rows held per tile
    HP = HB + 2                 # + permanent zero-pad border rows
    col0 = 0 if use_roll else 1  # data-column origin inside the pad scratch
    n1 = W + 2

    def kernel(*refs):
        if halo:
            main_ref, top_ref, bot_ref, w_ref, b_ref, beta_ref, o_ref, pad_ref = refs
        else:
            main_ref, w_ref, b_ref, beta_ref, o_ref, pad_ref = refs

        # permanent zero borders (only the border strips are written)
        pad_ref[0:1, :, :] = jnp.zeros((1, n1, C), jnp.float32)
        pad_ref[HP - 1:HP, :, :] = jnp.zeros((1, n1, C), jnp.float32)
        if use_roll:
            # circular column layout: data at [0, W), zeros at [W, W+2)
            pad_ref[:, W:W + 2, :] = jnp.zeros((HP, 2, C), jnp.float32)
        else:
            pad_ref[:, 0:1, :] = jnp.zeros((HP, 1, C), jnp.float32)
            pad_ref[:, W + 1:W + 2, :] = jnp.zeros((HP, 1, C), jnp.float32)

        # Row-validity mask: rows outside [0, H_true) act as the conv's zero
        # padding (true image top/bottom, clamped boundary halos and the rows
        # padding H up to a multiple of TH).  Applied at load and per layer.
        t = pl.program_id(1)
        row0 = t * TH - halo
        ridx = row0 + jax.lax.broadcasted_iota(jnp.int32, (HB, 1, 1), 0)
        rmask = jnp.logical_and(ridx >= 0, ridx < H_true).astype(jnp.float32)

        if halo:
            pad_ref[1:halo + 1, col0:col0 + W, :] = (
                top_ref[0].astype(jnp.float32) * rmask[0:halo])
        pad_ref[halo + 1:halo + 1 + TH, col0:col0 + W, :] = (
            main_ref[0].astype(jnp.float32) * rmask[halo:halo + TH])
        if halo:
            pad_ref[halo + 1 + TH:HB + 1, col0:col0 + W, :] = (
                bot_ref[0].astype(jnp.float32) * rmask[halo + TH:HB])

        if use_roll:
            sA = _roll_shift_static(-1, n1, np_conv)   # buf[j-1]  (dx = 0)
            sB = _roll_shift_static(+1, n1, np_conv)   # buf[j+1]  (dx = 2)

        for l in range(L):
            padf = pad_ref[...]                                   # (HP, W+2, C) f32
            if use_roll:
                # horizontal taps via sublane rolls (XLU) -> no vst realignment
                colsf = (pltpu.roll(padf, sA, axis=1), padf,
                         pltpu.roll(padf, sB, axis=1))
                colsb = tuple(c.astype(jnp.bfloat16) for c in colsf)  # 3 casts/layer
                taps = [colsb[dx][dy:dy + HB, 0:W, :]
                        for dy in range(3) for dx in range(3)]
                cur = padf[1:HB + 1, 0:W, :]                       # residual, aligned
            else:
                padb = padf.astype(jnp.bfloat16)                   # 1 cast/layer
                taps = [padb[dy:dy + HB, dx:dx + W, :]
                        for dy in range(3) for dx in range(3)]
                cur = padf[1:HB + 1, 1:W + 1, :]
            patch = jnp.concatenate(taps, axis=-1)                 # (HB, W, 9C) bf16
            acc = jnp.dot(patch.reshape(HB * W, 9 * C), w_ref[l],
                          preferred_element_type=jnp.float32)       # ONE K=9C matmul
            z = (acc + b_ref[l:l + 1, :]) * beta_ref[l:l + 1, :] \
                + cur.reshape(HB * W, C)
            pad_ref[1:HB + 1, col0:col0 + W, :] = (
                _leaky(z).reshape(HB, W, C) * rmask)

        o_ref[0] = pad_ref[halo + 1:halo + 1 + TH,
                           col0:col0 + W, :].astype(o_ref.dtype)

    return kernel


def convblock(feat, w8, b8, beta8, tile_cap=None):
    """8 x ResConv(c) fused in one kernel.  feat: (B, H, W, C) -> bf16."""
    B, H, W, C = feat.shape
    L = w8.shape[0]
    _roll_setup()
    TH, halo = _convblock_plan(H, W, C, L, tile_cap)
    nT = pl.cdiv(H, TH) if halo else 1
    Hp = nT * TH
    fpad = feat if Hp == H else jnp.pad(feat, ((0, 0), (0, Hp - H), (0, 0), (0, 0)))
    kernel = _make_convblock_kernel(TH, W, C, L, H, halo,
                                    _ROLL["ok"], _ROLL["np_convention"])
    in_specs = [pl.BlockSpec((1, TH, W, C), lambda bi, t: (bi, t, 0, 0))]
    args = [fpad]
    if halo:
        nb = TH // HALO
        last_blk = Hp // HALO - 1
        in_specs += [
            pl.BlockSpec((1, HALO, W, C),
                         lambda bi, t: (bi, jnp.maximum(t * nb - 1, 0), 0, 0)),
            pl.BlockSpec((1, HALO, W, C),
                         lambda bi, t: (bi, jnp.minimum((t + 1) * nb, last_blk), 0, 0)),
        ]
        args += [fpad, fpad]
    in_specs += [
        pl.BlockSpec((L, 9 * C, C), lambda bi, t: (0, 0, 0)),
        pl.BlockSpec((L, C), lambda bi, t: (0, 0)),
        pl.BlockSpec((L, C), lambda bi, t: (0, 0)),
    ]
    args += [w8, b8, beta8]
    HB = TH + 2 * halo
    cost = pl.CostEstimate(
        flops=2 * B * nT * HB * W * 9 * C * C * L,
        transcendentals=0,
        bytes_accessed=int(B * Hp * W * C * 2 * (3 if halo else 1)
                           + B * Hp * W * C * 2 + w8.size * 2))
    out = pl.pallas_call(
        kernel,
        out_shape=jax.ShapeDtypeStruct((B, Hp, W, C), jnp.bfloat16),
        grid=(B, nT),
        in_specs=in_specs,
        out_specs=pl.BlockSpec((1, TH, W, C), lambda bi, t: (bi, t, 0, 0)),
        scratch_shapes=[pltpu.VMEM((HB + 2, W + 2, C), jnp.float32)],
        compiler_params=_cparams(),
        cost_estimate=cost,
    )(*args)
    return out if Hp == H else out[:, :H]


# --------------------------------------------------------------------------
# Kernel 3: ConvTranspose2d(C, 24, 4, 2, 1) fused with MyPixelShuffle(2).
# One matmul per tile: (TH*w, 9C) @ (9C, 96); the 96 output channels are
# pre-permuted to pixel-shuffle order so one reshape+transpose in glue yields
# the final NCHW tensor.
# --------------------------------------------------------------------------
def _deconv_kernel(main_ref, halo_ref, w_ref, b_ref, o_ref):
    _, TH, Wd, n_out = o_ref.shape
    rows = jnp.concatenate([main_ref[0], halo_ref[0]], axis=0)     # (TH+2, Wp, C) bf16
    taps = [rows[oy:oy + TH, ox:ox + Wd, :] for oy in range(3) for ox in range(3)]
    patch = jnp.concatenate(taps, axis=-1)                          # (TH, Wd, 9C) bf16
    acc = jnp.dot(patch.reshape(TH * Wd, patch.shape[-1]), w_ref[...],
                  preferred_element_type=jnp.float32)
    acc = acc + b_ref[...]
    o_ref[0] = acc.reshape(TH, Wd, n_out).astype(o_ref.dtype)


def _deconv_tile(h, w, C, cap):
    per_row = (3 * _pad2d_bytes(w + 2, C, jnp.bfloat16)
               + 3 * _pad2d_bytes(w, 96, jnp.float32)
               + _pad2d_bytes(w, 9 * C, jnp.bfloat16))
    fixed = (2 * _pad2d_bytes(9 * C, 96, jnp.bfloat16)
             + 4 * _pad2d_bytes(w + 2, C, jnp.bfloat16) + (1 << 20))
    th = max(2, int((_VMEM_BUDGET - fixed) // per_row) // 2 * 2)
    th = min(th, _round_up(h, 2))
    if cap:
        th = max(2, min(th, cap // 2 * 2))
    return th


def deconv_pixelshuffle(feat, w96, b96, tile_cap=None):
    """feat: (B, h, w, C) NHWC bf16 -> (B, 6, 4h, 4w) NCHW f32."""
    B, h, w, C = feat.shape
    TH = _deconv_tile(h, w, C, tile_cap)
    nT = pl.cdiv(h, TH)
    Hp = nT * TH
    fp = jnp.pad(feat, ((0, 0), (1, Hp - h + 1), (1, 1), (0, 0)))   # (B, Hp+2, w+2, C)
    cost = pl.CostEstimate(
        flops=2 * B * Hp * w * 9 * C * 96,
        transcendentals=0,
        bytes_accessed=int(fp.size * 2 + B * Hp * w * 96 * 4 + w96.size * 2))
    d = pl.pallas_call(
        _deconv_kernel,
        out_shape=jax.ShapeDtypeStruct((B, Hp, w, 96), jnp.float32),
        grid=(B, nT),
        in_specs=[
            pl.BlockSpec((1, TH, w + 2, C), lambda bi, t: (bi, t, 0, 0)),
            pl.BlockSpec((1, 2, w + 2, C), lambda bi, t: (bi, ((t + 1) * TH) // 2, 0, 0)),
            pl.BlockSpec((9 * C, 96), lambda bi, t: (0, 0)),
            pl.BlockSpec((1, 96), lambda bi, t: (0, 0)),
        ],
        out_specs=pl.BlockSpec((1, TH, w, 96), lambda bi, t: (bi, t, 0, 0)),
        compiler_params=_cparams(),
        cost_estimate=cost,
    )(fp, fp, w96, b96)
    if Hp > h:
        d = d[:, :h]
    # channel k = 48*py + 24*ry + 12*px + 6*rx + c6  ->  one transpose to NCHW
    d = d.reshape(B, h, w, 4, 4, 6)
    return d.transpose(0, 5, 1, 3, 2, 4).reshape(B, 6, 4 * h, 4 * w)


# --------------------------------------------------------------------------
# Plain-JAX glue
# --------------------------------------------------------------------------
def bilinear_resize_nchw(x, out_h, out_w):
    # PyTorch-style bilinear, align_corners=False, no antialias.
    # TODO(synk): exact parity with F.interpolate for scale != 1 is untested
    # (boundary / antialias subtleties); main() uses scale=1.
    B, C, H, W = x.shape
    if out_h == H and out_w == W:
        return x
    ys = jnp.clip((jnp.arange(out_h, dtype=jnp.float32) + 0.5) * (H / out_h) - 0.5, 0.0, H - 1)
    xs = jnp.clip((jnp.arange(out_w, dtype=jnp.float32) + 0.5) * (W / out_w) - 0.5, 0.0, W - 1)
    y0 = jnp.floor(ys).astype(jnp.int32)
    x0 = jnp.floor(xs).astype(jnp.int32)
    y1 = jnp.minimum(y0 + 1, H - 1)
    x1 = jnp.minimum(x0 + 1, W - 1)
    wy = (ys - y0.astype(jnp.float32))[:, None]
    wx = (xs - x0.astype(jnp.float32))[None, :]
    g = lambda yi, xi: x[:, :, yi, :][:, :, :, xi]
    top = g(y0, x0) * (1 - wx) + g(y0, x1) * wx
    bot = g(y1, x0) * (1 - wx) + g(y1, x1) * wx
    return top * (1 - wy) + bot * wy


def _uniform(key, shape, fan_in):
    bound = 1.0 / (fan_in ** 0.5)
    return jax.random.uniform(key, shape, jnp.float32, -bound, bound)


# Transposed-conv phase taps for stride=2, pad=1, k=4:
#   phase -> ((kernel_index, padded_row_offset), ...)
_DECONV_TAPS = {0: ((1, 1), (3, 0)), 1: ((0, 2), (2, 1))}


def _pack_conv_s2_weight(w_oihw):
    # torch Conv2d weight (Cout, Cin, 3, 3) -> (16*Cin, Cout) in the
    # [tap (ty,tx)][phase (py,px)][ci] order of the space-to-depth patch.
    w = np.asarray(w_oihw, np.float32)
    Cout, Cin = w.shape[0], w.shape[1]
    out = np.zeros((4, 4, Cin, Cout), np.float32)
    for ty in (0, 1):
        for tx in (0, 1):
            for py in (0, 1):
                for px in (0, 1):
                    kh, kw = 2 * ty + py, 2 * tx + px
                    if kh < 3 and kw < 3:
                        out[2 * ty + tx, 2 * py + px] = w[:, :, kh, kw].T
    return jnp.asarray(out.reshape(16 * Cin, Cout), jnp.bfloat16)


def _pack_resconv_weight(w_loihw):
    # torch (L, Cout, Cin, 3, 3) -> (L, 9*Cin, Cout): (kh, kw) folded into K.
    w = np.asarray(w_loihw, np.float32)
    L, Cout, Cin = w.shape[0], w.shape[1], w.shape[2]
    w = np.transpose(w, (0, 3, 4, 2, 1))          # (L, kh, kw, Cin, Cout)
    return jnp.asarray(w.reshape(L, 9 * Cin, Cout), jnp.bfloat16)


def _pack_deconv_weight(w_iohw, b_o):
    # torch ConvTranspose2d weight (Cin, 24, 4, 4) + bias (24,) ->
    # (9*Cin, 96) weight / (1, 96) bias in fused ConvTranspose+PixelShuffle
    # channel order: k = 48*py + 24*ry + 12*px + 6*rx + c6.
    w = np.asarray(w_iohw, np.float32)
    b = np.asarray(b_o, np.float32)
    Cin = w.shape[0]
    w96 = np.zeros((9, Cin, 96), np.float32)
    b96 = np.zeros((96,), np.float32)
    for py in (0, 1):
        for px in (0, 1):
            for ry in (0, 1):
                for rx in (0, 1):
                    for c6 in range(6):
                        k = 48 * py + 24 * ry + 12 * px + 6 * rx + c6
                        ch24 = 4 * c6 + 2 * ry + rx
                        b96[k] = b[ch24]
                        for (kh, oy) in _DECONV_TAPS[py]:
                            for (kw, ox) in _DECONV_TAPS[px]:
                                w96[oy * 3 + ox, :, k] = w[:, ch24, kh, kw]
    return (jnp.asarray(w96.reshape(9 * Cin, 96), jnp.bfloat16),
            jnp.asarray(b96.reshape(1, 96), jnp.float32))


# ---- pure-JAX f32 reference ops (validation only) ----
def _ref_conv(x, w_oihw, b, stride, pad):
    y = jax.lax.conv_general_dilated(
        x, w_oihw, window_strides=(stride, stride),
        padding=[(pad, pad), (pad, pad)],
        dimension_numbers=("NCHW", "OIHW", "NCHW"),
        precision=jax.lax.Precision.HIGHEST)
    return y + b[None, :, None, None]


def _ref_deconv(x, w_iohw, b, stride=2, pad=1):
    # torch ConvTranspose2d == lhs-dilated conv with the flipped/swapped kernel
    w = jnp.flip(w_iohw, axis=(2, 3)).transpose(1, 0, 2, 3)     # (Cout, Cin, kh, kw)
    k = w.shape[-1]
    y = jax.lax.conv_general_dilated(
        x, w, window_strides=(1, 1),
        padding=[(k - 1 - pad, k - 1 - pad)] * 2,
        lhs_dilation=(stride, stride),
        dimension_numbers=("NCHW", "OIHW", "NCHW"),
        precision=jax.lax.Precision.HIGHEST)
    return y + b[None, :, None, None]


def _ref_pixelshuffle(x, r):
    b, c, hh, hw = x.shape
    oc = c // (r * r)
    x = x.reshape(b, oc, r, r, hh, hw)
    return x.transpose(0, 1, 4, 2, 5, 3).reshape(b, oc, hh * r, hw * r)


class IFBlockPallas:
    """JAX/Pallas port of IFBlock(in_planes, c).  Parameters are synthetic
    (PyTorch-default uniform init).  `tile_rows` caps the spatial tile height
    (None = auto-size from the per-generation VMEM budget)."""

    def __init__(self, in_planes, c=64, key=jax.random.PRNGKey(0), tile_rows=None):
        self.in_planes, self.c = in_planes, c
        self.tile_rows = tile_rows
        ks = jax.random.split(key, 8)
        c2 = c // 2

        w0 = _uniform(ks[0], (c2, in_planes, 3, 3), in_planes * 9)
        b0 = _uniform(ks[1], (c2,), in_planes * 9)
        w1 = _uniform(ks[2], (c, c2, 3, 3), c2 * 9)
        b1 = _uniform(ks[3], (c,), c2 * 9)
        wcb = _uniform(ks[4], (8, c, c, 3, 3), c * 9)
        bcb = _uniform(ks[5], (8, c), c * 9)
        beta = jnp.ones((8, c), jnp.float32)      # beta init = ones (spec)
        wl = _uniform(ks[6], (c, 24, 4, 4), c * 16)
        bl = _uniform(ks[7], (24,), c * 16)

        # raw torch-layout weights kept for the pure-JAX f32 reference
        self.raw = dict(w0=w0, b0=b0, w1=w1, b1=b1, wcb=wcb, bcb=bcb,
                        beta=beta, wl=wl, bl=bl)

        # kernel-layout weights (bf16 matmul operands, f32 bias/beta)
        self.w0 = _pack_conv_s2_weight(w0)
        self.b0 = b0.reshape(1, c2)
        self.w1 = _pack_conv_s2_weight(w1)
        self.b1 = b1.reshape(1, c)
        self.wcb = _pack_resconv_weight(wcb)
        self.bcb = bcb
        self.betacb = beta
        self.wl, self.bl = _pack_deconv_weight(wl, bl)

    def __call__(self, x, flow=None, scale=1):
        B, _, H, W = x.shape
        if scale != 1:
            x = bilinear_resize_nchw(x, int(H / scale), int(W / scale))
        if flow is not None:
            if scale != 1:
                flow = bilinear_resize_nchw(flow, x.shape[2], x.shape[3]) / scale
            x = jnp.concatenate([x, flow], axis=1)
        assert x.shape[1] == self.in_planes, (
            "IFBlockPallas built for in_planes=%d but got %d input channels "
            "(in_planes must include the 4 flow channels when flow is passed)"
            % (self.in_planes, x.shape[1]))

        xh = jnp.transpose(x, (0, 2, 3, 1))                              # -> NHWC
        f = conv3x3_s2_lrelu(xh, self.w0, self.b0, self.tile_rows)       # (B,H/2,W/2,c/2)
        f = conv3x3_s2_lrelu(f, self.w1, self.b1, self.tile_rows)        # (B,H/4,W/4,c)
        f = convblock(f, self.wcb, self.bcb, self.betacb, self.tile_rows)
        t = deconv_pixelshuffle(f, self.wl, self.bl, self.tile_rows)     # NCHW (B,6,H,W)
        if scale != 1:
            t = bilinear_resize_nchw(t, H, W)
        return t[:, :4] * scale, t[:, 4:5]

    def reference(self, x, flow=None, scale=1):
        """Pure-JAX f32 reference of the same forward pass (validation)."""
        r = self.raw
        B, _, H, W = x.shape
        if scale != 1:
            x = bilinear_resize_nchw(x, int(H / scale), int(W / scale))
        if flow is not None:
            if scale != 1:
                flow = bilinear_resize_nchw(flow, x.shape[2], x.shape[3]) / scale
            x = jnp.concatenate([x, flow], axis=1)
        f = _leaky(_ref_conv(x, r["w0"], r["b0"], 2, 1))
        f = _leaky(_ref_conv(f, r["w1"], r["b1"], 2, 1))
        for l in range(8):
            f = _leaky(_ref_conv(f, r["wcb"][l], r["bcb"][l], 1, 1)
                       * r["beta"][l][None, :, None, None] + f)
        t = _ref_pixelshuffle(_ref_deconv(f, r["wl"], r["bl"]), 2)
        if scale != 1:
            t = bilinear_resize_nchw(t, H, W)
        return t[:, :4] * scale, t[:, 4:5]


if __name__ == "__main__":
    key = jax.random.PRNGKey(0)
    kx, kf, kp = jax.random.split(key, 3)
    B, img_ch, flow_ch, H, W = 2, 7, 4, 72, 64
    x = jax.random.normal(kx, (B, img_ch, H, W), jnp.float32)
    flow_in = 0.5 * jax.random.normal(kf, (B, flow_ch, H, W), jnp.float32)

    # in_planes includes the 4 flow channels (matches how RIFE builds IFBlock).
    # tile_rows=16 caps the tile height so the multi-tile / halo / row-mask /
    # pad-and-crop code paths are all exercised at this toy size (convblock
    # feature height is 18, not a multiple of 8); production uses None (auto).
    block = IFBlockPallas(img_ch + flow_ch, c=64, key=kp, tile_rows=16)
    flow, mask = block(x, flow=flow_in, scale=1)
    jax.block_until_ready((flow, mask))

    assert flow.shape == (B, 4, H, W), flow.shape
    assert mask.shape == (B, 1, H, W), mask.shape
    assert bool(jnp.all(jnp.isfinite(flow))) and bool(jnp.all(jnp.isfinite(mask)))

    # Numerical check against a pure-JAX f32 reference of the same module
    # (kernel path uses bf16 matmuls / bf16 inter-kernel activations).
    flow_ref, mask_ref = block.reference(x, flow=flow_in, scale=1)
    np.testing.assert_allclose(np.asarray(flow), np.asarray(flow_ref),
                               atol=2e-2, rtol=5e-2)
    np.testing.assert_allclose(np.asarray(mask), np.asarray(mask_ref),
                               atol=2e-2, rtol=5e-2)
    print("KERNEL_OK")
</pallas_src>

<mosaic_0001>
module attributes {stable_mosaic.version = 11 : i64} {
  func.func @_conv0_kernel(%arg0: i32, %arg1: i32, %arg2: memref<1x16x33x44xbf16, #tpu.memory_space<vmem>>, %arg3: memref<1x1x33x44xbf16, #tpu.memory_space<vmem>>, %arg4: memref<176x32xbf16, #tpu.memory_space<vmem>>, %arg5: memref<1x32xf32, #tpu.memory_space<vmem>>, %arg6: memref<1x16x32x32xbf16, #tpu.memory_space<vmem>>) attributes {dimension_semantics = [#tpu.dimension_semantics<parallel>, #tpu.dimension_semantics<parallel>], iteration_bounds = array<i64: 2, 3>, scalar_prefetch = 0 : i64, scratch_operands = 0 : i64, tpu.core_type = #tpu.core_type<tc>, window_params = [{transform_indices = @transform_0, window_bounds = array<i64: 1, 16, 33, 44>}, {transform_indices = @transform_1, window_bounds = array<i64: 1, 1, 33, 44>}, {pipeline_mode = #tpu.pipeline_mode<synchronous>, transform_indices = @transform_2, window_bounds = array<i64: 176, 32>}, {pipeline_mode = #tpu.pipeline_mode<synchronous>, transform_indices = @transform_3, window_bounds = array<i64: 1, 32>}, {transform_indices = @transform_4, window_bounds = array<i64: 1, 16, 32, 32>}]} {
    %c0 = arith.constant 0 : index
    %c0_0 = arith.constant 0 : index
    %c0_1 = arith.constant 0 : index
    %c0_2 = arith.constant 0 : index
    %0 = vector.load %arg2[%c0, %c0_0, %c0_1, %c0_2] : memref<1x16x33x44xbf16, #tpu.memory_space<vmem>>, vector<1x16x33x44xbf16>
    %1 = vector.shape_cast %0 : vector<1x16x33x44xbf16> to vector<16x33x44xbf16>
    %c0_3 = arith.constant 0 : index
    %c0_4 = arith.constant 0 : index
    %c0_5 = arith.constant 0 : index
    %c0_6 = arith.constant 0 : index
    %2 = vector.load %arg3[%c0_3, %c0_4, %c0_5, %c0_6] : memref<1x1x33x44xbf16, #tpu.memory_space<vmem>>, vector<1x1x33x44xbf16>
    %3 = vector.shape_cast %2 : vector<1x1x33x44xbf16> to vector<1x33x44xbf16>
    %4 = tpu.concatenate %1, %3 in 0 : vector<16x33x44xbf16>, vector<1x33x44xbf16> -> vector<17x33x44xbf16>
    %5 = vector.extract_strided_slice %4 {offsets = [0, 0, 0], sizes = [16, 32, 44], strides = [1, 1, 1]} : vector<17x33x44xbf16> to vector<16x32x44xbf16>
    %6 = vector.extract_strided_slice %4 {offsets = [0, 1, 0], sizes = [16, 32, 44], strides = [1, 1, 1]} : vector<17x33x44xbf16> to vector<16x32x44xbf16>
    %7 = vector.extract_strided_slice %4 {offsets = [1, 0, 0], sizes = [16, 32, 44], strides = [1, 1, 1]} : vector<17x33x44xbf16> to vector<16x32x44xbf16>
    %8 = vector.extract_strided_slice %4 {offsets = [1, 1, 0], sizes = [16, 32, 44], strides = [1, 1, 1]} : vector<17x33x44xbf16> to vector<16x32x44xbf16>
    %9 = tpu.concatenate %5, %6, %7, %8 in 2 : vector<16x32x44xbf16>, vector<16x32x44xbf16>, vector<16x32x44xbf16>, vector<16x32x44xbf16> -> vector<16x32x176xbf16>
    %10 = vector.shape_cast %9 : vector<16x32x176xbf16> to vector<512x176xbf16>
    %c0_7 = arith.constant 0 : index
    %c0_8 = arith.constant 0 : index
    %11 = vector.load %arg4[%c0_7, %c0_8] : memref<176x32xbf16, #tpu.memory_space<vmem>>, vector<176x32xbf16>
    %cst = arith.constant dense<0.000000e+00> : vector<512x32xf32>
    %12 = tpu.matmul %10, %11, %cst {dimension_numbers = #tpu.dot_dimension_numbers<[1], [0], [0], [1], [0, 0, 1, 1], [], []>} : vector<512x176xbf16>, vector<176x32xbf16>, vector<512x32xf32> -> vector<512x32xf32>
    %c0_9 = arith.constant 0 : index
    %c0_10 = arith.constant 0 : index
    %13 = vector.load %arg5[%c0_9, %c0_10] : memref<1x32xf32, #tpu.memory_space<vmem>>, vector<1x32xf32>
    %14 = vector.broadcast %13 : vector<1x32xf32> to vector<512x32xf32>
    %15 = arith.addf %12, %14 : vector<512x32xf32>
    %cst_11 = arith.constant 0.000000e+00 : f32
    %16 = vector.broadcast %cst_11 : f32 to vector<512x32xf32>
    %17 = arith.cmpf oge, %15, %16 : vector<512x32xf32>
    %cst_12 = arith.constant 2.000000e-01 : f32
    %18 = vector.broadcast %cst_12 : f32 to vector<512x32xf32>
    %19 = arith.mulf %18, %15 : vector<512x32xf32>
    %20 = arith.select %17, %15, %19 : vector<512x32xi1>, vector<512x32xf32>
    %21 = vector.shape_cast %20 : vector<512x32xf32> to vector<16x32x32xf32>
    %22 = arith.truncf %21 : vector<16x32x32xf32> to vector<16x32x32xbf16>
    %c0_13 = arith.constant 0 : index
    %c0_14 = arith.constant 0 : index
    %c0_15 = arith.constant 0 : index
    %c0_16 = arith.constant 0 : index
    %23 = vector.load %arg6[%c0_13, %c0_14, %c0_15, %c0_16] : memref<1x16x32x32xbf16, #tpu.memory_space<vmem>>, vector<1x16x32x32xbf16>
    %24 = vector.shape_cast %23 : vector<1x16x32x32xbf16> to vector<16x32x32xbf16>
    %25 = vector.shape_cast %22 : vector<16x32x32xbf16> to vector<1x16x32x32xbf16>
    tpu.vector_store %arg6[%c0_13, %c0_14, %c0_15, %c0_16], %25 {strides = array<i32>} : memref<1x16x32x32xbf16, #tpu.memory_space<vmem>>, vector<1x16x32x32xbf16>,
    return
  }
  func.func @transform_0(%arg0: i32, %arg1: i32) -> (i32, i32, i32, i32) {
    %c0_i32 = arith.constant 0 : i32
    %c0_i32_0 = arith.constant 0 : i32
    %c0_i32_1 = arith.constant 0 : i32
    return %arg0, %arg1, %c0_i32, %c0_i32_0 : i32, i32, i32, i32
  }
  func.func @transform_1(%arg0: i32, %arg1: i32) -> (i32, i32, i32, i32) {
    %c1_i32 = arith.constant 1 : i32
    %0 = arith.addi %arg1, %c1_i32 : i32
    %c16_i32 = arith.constant 16 : i32
    %1 = arith.muli %0, %c16_i32 : i32
    %c0_i32 = arith.constant 0 : i32
    %c0_i32_0 = arith.constant 0 : i32
    %c0_i32_1 = arith.constant 0 : i32
    return %arg0, %1, %c0_i32, %c0_i32_0 : i32, i32, i32, i32
  }
  func.func @transform_2(%arg0: i32, %arg1: i32) -> (i32, i32) {
    %c0_i32 = arith.constant 0 : i32
    %c0_i32_0 = arith.constant 0 : i32
    %c0_i32_1 = arith.constant 0 : i32
    return %c0_i32, %c0_i32_0 : i32, i32
  }
  func.func @transform_3(%arg0: i32, %arg1: i32) -> (i32, i32) {
    %c0_i32 = arith.constant 0 : i32
    %c0_i32_0 = arith.constant 0 : i32
    %c0_i32_1 = arith.constant 0 : i32
    return %c0_i32, %c0_i32_0 : i32, i32
  }
  func.func @transform_4(%arg0: i32, %arg1: i32) -> (i32, i32, i32, i32) {
    %c0_i32 = arith.constant 0 : i32
    %c0_i32_0 = arith.constant 0 : i32
    %c0_i32_1 = arith.constant 0 : i32
    return %arg0, %arg1, %c0_i32, %c0_i32_0 : i32, i32, i32, i32
  }
}

</mosaic_0001>

<llo_original>
// kernel: tpu_custom_call.1
$region0: #{tpu_custom_call.1}
  #allocation0 [shape = 'u32[]', space=smem, size = 0x4, offset = 0x4, fixed_abs, tag = 'smem constant byte address 0x4 - core index']
  #allocation1 [shape = 'u32[72,128]{1,0:T(1,128)}', space=vmem, size = 0x9000, scoped, tag = 'internal scratch']
  %s0 = inlined_call_operand.vmem [shape: bf16[2,49,33,44], index: 0, kind: input, shape index: {}]
  %s1 = inlined_call_operand.vmem [shape: bf16[2,49,33,44], index: 1, kind: input, shape index: {}]
  %s2 = inlined_call_operand.vmem [shape: bf16[176,32], index: 2, kind: input, shape index: {}]
  %s3 = inlined_call_operand.vmem [shape: f32[1,32], index: 3, kind: input, shape index: {}]
  %s4 = inlined_call_operand.vmem [shape: bf16[2,48,32,32], index: 4, kind: output, shape index: {}]
  %s5 = sld [smem:[#allocation0]]
  $region49: #{tpu_custom_call.1} parent=0
    _
  %s7 = ssub.s32 1, %s5
  %s8 = scalar_select 0, %s7, %s5
  loop: start=0, step=1, limit=8
  $region2: #{tpu_custom_call.1} parent=0 // loop_pre_header
    _
  $region3: #{tpu_custom_call.1} parent=0 // loop_header
    %s10 = sphi 0, %s14
    %p11 = scmp.ge.s32.totalorder %s10, 8
    %s17 = sphi 0, %s29
    %s18 = sphi 0, %s25
    %s19 = sphi 0, %s17
    %s20 = sphi 0, %s18
    %s21 = sphi 0, %s19
    %s22 = sphi 0, %s20
    %s34 = sphi 0, %s36
    %s37 = sphi 0, %s34
    %s38 = sphi 0, %s37
    %s54 = sphi 0, %s38
    %s66 = sphi 0, %s68
    %s69 = sphi 0, %s66
    %s70 = sphi 0, %s69
    %s86 = sphi 0, %s70
    %s90 = sphi 0, %s90
    %s92 = sphi 0, %s90
    %s93 = sphi 0, %s92
    %s107 = sphi 0, %s93
    %s111 = sphi 0, %s111
    %s113 = sphi 0, %s111
    %s114 = sphi 0, %s113
    %s128 = sphi 0, %s114
    %s136 = sphi 0, %s138
    %s139 = sphi 0, %s136
    %s140 = sphi 0, %s139
    %s156 = sphi 0, %s140
  $region4: #{tpu_custom_call.1} parent=0 // loop_header_branch
    %13 = sbr.rel (%p11) target = $region8
  $region5: #{tpu_custom_call.1} parent=0 // loop_body
    %s15 = ssub.s32 %s10, 1
    %s16 = ssub.s32 %s10, 2
    %s23 = sadd.s32 1, %s18
    %p24 = scmp.ge.s32.totalorder %s23, 3
    %s25 = scalar_select %p24, 0, %s23
    %s26 = sadd.s32 1, %s17
    %s27 = scalar_select %p24, %s26, %s17
    %p28 = scmp.ge.s32.totalorder %s27, 2
    %s29 = scalar_select %p28, 0, %s27
    %s30 = ssub.s32 %s17, %s29
    %s31 = ssub.s32 %s18, %s25
    %s32 = sor.u32 %s30, %s31
    %p33 = scmp.eq.s32.totalorder %s32, 0
    %s35 = sadd.s32 %s34, 1
    %s36 = scalar_select %p33, %s34, %s35
    %p39 = pneg %p33
    %p40 = scmp.eq.s32.totalorder %s10, 5
    %p41 = por %p39, %p40
    %p42 = scmp.ne.s32.totalorder %s34, %s37
    %p43 = scmp.eq.s32.totalorder %s10, 0
    %p44 = por %p42, %p43
    %p45 = scmp.ne.s32.totalorder %s34, %s37
    %p46 = scmp.eq.s32.totalorder %s15, 5
    %p47 = por %p45, %p46
    %p48 = scmp.ne.s32.totalorder %s37, %s38
    %p49 = scmp.eq.s32.totalorder %s15, 0
    %p50 = por %p48, %p49
    %p51 = scmp.ne.s32.totalorder %s37, %s38
    %p52 = scmp.eq.s32.totalorder %s16, 5
    %p53 = por %p51, %p52
    %p55 = scmp.ne.s32.totalorder %s38, %s54
    %p56 = scmp.eq.s32.totalorder %s16, 0
    %p57 = por %p55, %p56
    %s58 = sadd.s32 %s18, 1
    %s59 = smul.u32 %s58, 16
    %s60 = sadd.s32 %s25, 1
    %s61 = smul.u32 %s60, 16
    %s62 = ssub.s32 %s17, %s29
    %s63 = ssub.s32 %s59, %s61
    %s64 = sor.u32 %s62, %s63
    %p65 = scmp.eq.s32.totalorder %s64, 0
    %s67 = sadd.s32 %s66, 1
    %s68 = scalar_select %p65, %s66, %s67
    %p71 = pneg %p65
    %p72 = scmp.eq.s32.totalorder %s10, 5
    %p73 = por %p71, %p72
    %p74 = scmp.ne.s32.totalorder %s66, %s69
    %p75 = scmp.eq.s32.totalorder %s10, 0
    %p76 = por %p74, %p75
    %p77 = scmp.ne.s32.totalorder %s66, %s69
    %p78 = scmp.eq.s32.totalorder %s15, 5
    %p79 = por %p77, %p78
    %p80 = scmp.ne.s32.totalorder %s69, %s70
    %p81 = scmp.eq.s32.totalorder %s15, 0
    %p82 = por %p80, %p81
    %p83 = scmp.ne.s32.totalorder %s69, %s70
    %p84 = scmp.eq.s32.totalorder %s16, 5
    %p85 = por %p83, %p84
    %p87 = scmp.ne.s32.totalorder %s70, %s86
    %p88 = scmp.eq.s32.totalorder %s16, 0
    %p89 = por %p87, %p88
    %s91 = sadd.s32 %s90, 1
    %p94 = scmp.eq.s32.totalorder %s10, 5
    %p95 = scmp.ne.s32.totalorder %s90, %s92
    %p96 = scmp.eq.s32.totalorder %s10, 0
    %p97 = por %p95, %p96
    %p98 = scmp.ne.s32.totalorder %s90, %s92
    %p99 = scmp.eq.s32.totalorder %s15, 5
    %p100 = por %p98, %p99
    %p101 = scmp.ne.s32.totalorder %s92, %s93
    %p102 = scmp.eq.s32.totalorder %s15, 0
    %p103 = por %p101, %p102
    %p104 = scmp.ne.s32.totalorder %s92, %s93
    %p105 = scmp.eq.s32.totalorder %s16, 5
    %p106 = por %p104, %p105
    %p108 = scmp.ne.s32.totalorder %s93, %s107
    %p109 = scmp.eq.s32.totalorder %s16, 0
    %p110 = por %p108, %p109
    %s112 = sadd.s32 %s111, 1
    %p115 = scmp.eq.s32.totalorder %s10, 5
    %p116 = scmp.ne.s32.totalorder %s111, %s113
    %p117 = scmp.eq.s32.totalorder %s10, 0
    %p118 = por %p116, %p117
    %p119 = scmp.ne.s32.totalorder %s111, %s113
    %p120 = scmp.eq.s32.totalorder %s15, 5
    %p121 = por %p119, %p120
    %p122 = scmp.ne.s32.totalorder %s113, %s114
    %p123 = scmp.eq.s32.totalorder %s15, 0
    %p124 = por %p122, %p123
    %p125 = scmp.ne.s32.totalorder %s113, %s114
    %p126 = scmp.eq.s32.totalorder %s16, 5
    %p127 = por %p125, %p126
    %p129 = scmp.ne.s32.totalorder %s114, %s128
    %p130 = scmp.eq.s32.totalorder %s16, 0
    %p131 = por %p129, %p130
    %s132 = ssub.s32 %s17, %s29
    %s133 = ssub.s32 %s18, %s25
    %s134 = sor.u32 %s132, %s133
    %p135 = scmp.eq.s32.totalorder %s134, 0
    %s137 = sadd.s32 %s136, 1
    %s138 = scalar_select %p135, %s136, %s137
    %p141 = pneg %p135
    %p142 = scmp.eq.s32.totalorder %s10, 5
    %p143 = por %p141, %p142
    %p144 = scmp.ne.s32.totalorder %s136, %s139
    %p145 = scmp.eq.s32.totalorder %s10, 0
    %p146 = por %p144, %p145
    %p147 = scmp.ne.s32.totalorder %s136, %s139
    %p148 = scmp.eq.s32.totalorder %s15, 5
    %p149 = por %p147, %p148
    %p150 = scmp.ne.s32.totalorder %s139, %s140
    %p151 = scmp.eq.s32.totalorder %s15, 0
    %p152 = por %p150, %p151
    %p153 = scmp.ne.s32.totalorder %s139, %s140
    %p154 = scmp.eq.s32.totalorder %s16, 5
    %p155 = por %p153, %p154
    %p157 = scmp.ne.s32.totalorder %s140, %s156
    %p158 = scmp.eq.s32.totalorder %s16, 0
    %p159 = por %p157, %p158
    %p160 = scmp.le.s32.totalorder 1, %s10
    %p161 = scmp.lt.s32.totalorder %s10, 7
    %p162 = pnand %p160, %p161
    %p163 = pneg %p162
    // Predicated region
    $region9: #{tpu_custom_call.1} parent=5 // pred_check
      _
    $region10: #{tpu_custom_call.1} parent=5 // pred_check_branch
      %165 = sbr.rel (%p162) target = $region12
    $region11: #{tpu_custom_call.1} parent=5 // pred_region
      %s166 = ssub.s32 %s10, 1
      // Predicated region
      $region13: #{tpu_custom_call.1} parent=11 // pred_check
        %p167 = pneg %p103
      $region14: #{tpu_custom_call.1} parent=11 // pred_check_branch
        %169 = sbr.rel (%p167) target = $region16
      $region15: #{tpu_custom_call.1} parent=11 // pred_region
        _
      $region16: #{tpu_custom_call.1} parent=11 // pred_fallthru
        _
      // Predicated region
      $region17: #{tpu_custom_call.1} parent=11 // pred_check
        %p170 = pneg %p124
      $region18: #{tpu_custom_call.1} parent=11 // pred_check_branch
        %172 = sbr.rel (%p170) target = $region20
      $region19: #{tpu_custom_call.1} parent=11 // pred_region
        _
      $region20: #{tpu_custom_call.1} parent=11 // pred_fallthru
        _
    $region12: #{tpu_custom_call.1} parent=5 // pred_fallthru
      _
    %p173 = scmp.lt.s32.totalorder %s10, 6
    // Predicated region
    $region21: #{tpu_custom_call.1} parent=5 // pred_check
      %p174 = pneg %p173
    $region22: #{tpu_custom_call.1} parent=5 // pred_check_branch
      %176 = sbr.rel (%p174) target = $region24
    $region23: #{tpu_custom_call.1} parent=5 // pred_region
      // Predicated region
      $region25: #{tpu_custom_call.1} parent=23 // pred_check
        %p177 = pneg %p44
      $region26: #{tpu_custom_call.1} parent=23 // pred_check_branch
        %179 = sbr.rel (%p177) target = $region28
      $region27: #{tpu_custom_call.1} parent=23 // pred_region
        %s180 = smul.u32 16, %s18
        %s181 = ssub.s32 49, %s180
        %p182 = scmp.lt.s32.totalorder %s181, 16
        %s183 = scalar_select %p182, %s181, 16
        %s184 = smul.u32 4, %s183
        %s185 = smul.u32 %s184, 5
        %p186 = scmp.lt.s32.totalorder %s17, 1
        %s187 = scalar_select %p186, %s17, 1
        %p188 = scmp.lt.s32.totalorder %s180, 48
        %s189 = scalar_select %p188, %s180, 48
        %s190 = smul.addr %s189, 5
        %s191 = smul.addr %s187, 245
        %s192 = sadd.s32 %s190, %s191
        %s193 = smul.addr %s192, 4
        %s194 = scalar_lea.vmem %s0, %s193
        %s195 = smul.u32 16, %s18
        %s196 = ssub.s32 49, %s195
        %p197 = scmp.lt.s32.totalorder %s196, 16
        %s198 = scalar_select %p197, %s196, 16
        %s199 = smul.u32 4, %s198
        %s200 = smul.u32 %s199, 5
      $region28: #{tpu_custom_call.1} parent=23 // pred_fallthru
        _
      // Predicated region
      $region29: #{tpu_custom_call.1} parent=23 // pred_check
        %p201 = pneg %p76
      $region30: #{tpu_custom_call.1} parent=23 // pred_check_branch
        %203 = sbr.rel (%p201) target = $region32
      $region31: #{tpu_custom_call.1} parent=23 // pred_region
        %s204 = sadd.s32 %s18, 1
        %s205 = smul.u32 %s204, 16
        %p206 = scmp.lt.s32.totalorder %s17, 1
        %s207 = scalar_select %p206, %s17, 1
        %p208 = scmp.lt.s32.totalorder %s205, 48
        %s209 = scalar_select %p208, %s205, 48
        %s210 = smul.addr %s209, 5
        %s211 = smul.addr %s207, 245
        %s212 = sadd.s32 %s210, %s211
        %s213 = smul.addr %s212, 4
        %s214 = scalar_lea.vmem %s1, %s213
        %s215 = sadd.s32 %s18, 1
        %s216 = smul.u32 %s215, 16
      $region32: #{tpu_custom_call.1} parent=23 // pred_fallthru
        _
    $region24: #{tpu_custom_call.1} parent=5 // pred_fallthru
      _
    %p217 = scmp.le.s32.totalorder 1, %s10
    %p218 = scmp.lt.s32.totalorder %s10, 7
    %p219 = pnand %p217, %p218
    %p220 = pneg %p219
    // Predicated region
    $region33: #{tpu_custom_call.1} parent=5 // pred_check
      _
    $region34: #{tpu_custom_call.1} parent=5 // pred_check_branch
      %222 = sbr.rel (%p219) target = $region36
    $region35: #{tpu_custom_call.1} parent=5 // pred_region
      %s223 = ssub.s32 %s10, 1
      %s224 = smul.u32 16, %s20
      %s225 = ssub.s32 49, %s224
      %p226 = scmp.lt.s32.totalorder %s225, 16
      %s227 = scalar_select %p226, %s225, 16
      %s228 = smul.u32 4, %s227
      %s229 = smul.u32 %s228, 5
      %p230 = scmp.lt.s32.totalorder %s19, 1
      %s231 = scalar_select %p230, %s19, 1
      %p232 = scmp.lt.s32.totalorder %s224, 48
      %s233 = scalar_select %p232, %s224, 48
      %s234 = smul.addr %s233, 5
      %s235 = smul.addr %s231, 245
      %s236 = sadd.s32 %s234, %s235
      %s237 = smul.addr %s236, 4
      %s238 = scalar_lea.vmem %s0, %s237
      %p239 = pneg %p50
      %p240 = pneg %p47
      %s241 = sadd.s32 %s20, 1
      %s242 = smul.u32 %s241, 16
      %p243 = scmp.lt.s32.totalorder %s19, 1
      %s244 = scalar_select %p243, %s19, 1
      %p245 = scmp.lt.s32.totalorder %s242, 48
      %s246 = scalar_select %p245, %s242, 48
      %s247 = smul.addr %s246, 5
      %s248 = smul.addr %s244, 245
      %s249 = sadd.s32 %s247, %s248
      %s250 = smul.addr %s249, 4
      %s251 = scalar_lea.vmem %s1, %s250
      %p252 = pneg %p82
      %p253 = pneg %p79
      %p254 = pneg %p103
      %p255 = pneg %p100
      %p256 = pneg %p124
      %p257 = pneg %p121
      %p258 = pneg %p152
      %p259 = pneg %p149
      %s260 = smul.u32 16, %s20
      %p261 = scmp.lt.s32.totalorder %s19, 1
      %s262 = scalar_select %p261, %s19, 1
      %p263 = scmp.lt.s32.totalorder %s260, 47
      %s264 = scalar_select %p263, %s260, 47
      %s265 = smul.addr %s264, 4
      %s266 = smul.addr %s262, 192
      %s267 = sadd.s32 %s265, %s266
      %s268 = smul.addr %s267, 4
      %s269 = scalar_lea.vmem %s4, %s268
      %s270 = smul.u32 16, %s20
      %s271 = ssub.s32 49, %s270
      %p272 = scmp.lt.s32.totalorder %s271, 16
      %s273 = scalar_select %p272, %s271, 16
      %s274 = smul.u32 4, %s273
      %s275 = smul.u32 %s274, 5
      %p276 = scmp.lt.s32.totalorder %s19, 1
      %s277 = scalar_select %p276, %s19, 1
      %p278 = scmp.lt.s32.totalorder %s270, 48
      %s279 = scalar_select %p278, %s270, 48
      %s280 = smul.addr %s279, 5
      %s281 = smul.addr %s277, 245
      %s282 = sadd.s32 %s280, %s281
      %s283 = smul.addr %s282, 4
      %s284 = scalar_lea.vmem %s0, %s283
      %s285 = smul.u32 16, %s20
      %s286 = ssub.s32 49, %s285
      %p287 = scmp.lt.s32.totalorder %s286, 16
      %s288 = scalar_select %p287, %s286, 16
      %s289 = smul.u32 4, %s288
      %s290 = smul.u32 %s289, 5
      %s291 = sadd.s32 %s20, 1
      %s292 = smul.u32 %s291, 16
      %p293 = scmp.lt.s32.totalorder %s19, 1
      %s294 = scalar_select %p293, %s19, 1
      %p295 = scmp.lt.s32.totalorder %s292, 48
      %s296 = scalar_select %p295, %s292, 48
      %s297 = smul.addr %s296, 5
      %s298 = smul.addr %s294, 245
      %s299 = sadd.s32 %s297, %s298
      %s300 = smul.addr %s299, 4
      %s301 = scalar_lea.vmem %s1, %s300
      %s302 = sadd.s32 %s20, 1
      %s303 = smul.u32 %s302, 16
      %s304 = smul.u32 16, %s20
      %p305 = scmp.lt.s32.totalorder %s19, 1
      %s306 = scalar_select %p305, %s19, 1
      %p307 = scmp.lt.s32.totalorder %s304, 47
      %s308 = scalar_select %p307, %s304, 47
      %s309 = smul.addr %s308, 4
      %s310 = smul.addr %s306, 192
      %s311 = sadd.s32 %s309, %s310
      %s312 = smul.addr %s311, 4
      %s313 = scalar_lea.vmem %s4, %s312
      %s314 = smul.u32 16, %s20
      %v316 = vld [vmem:[%s284] sm:$0xf]
      %v317 = vld [vmem:[%s284 + $0x4] sm:$0xf]
      %v318 = vld [vmem:[%s284 + $0x8] sm:$0xf]
      %v319 = vld [vmem:[%s284 + $0xc] sm:$0xf]
      %v320 = vld [vmem:[%s284 + $0x10] sm:$0x1]
      %v321 = vld [vmem:[%s284 + $0x14] sm:$0xf]
      %v322 = vld [vmem:[%s284 + $0x18] sm:$0xf]
      %v323 = vld [vmem:[%s284 + $0x1c] sm:$0xf]
      %v324 = vld [vmem:[%s284 + $0x20] sm:$0xf]
      %v325 = vld [vmem:[%s284 + $0x24] sm:$0x1]
      %v326 = vld [vmem:[%s284 + $0x28] sm:$0xf]
      %v327 = vld [vmem:[%s284 + $0x2c] sm:$0xf]
      %v328 = vld [vmem:[%s284 + $0x30] sm:$0xf]
      %v329 = vld [vmem:[%s284 + $0x34] sm:$0xf]
      %v330 = vld [vmem:[%s284 + $0x38] sm:$0x1]
      %v331 = vld [vmem:[%s284 + $0x3c] sm:$0xf]
      %v332 = vld [vmem:[%s284 + $0x40] sm:$0xf]
      %v333 = vld [vmem:[%s284 + $0x44] sm:$0xf]
      %v334 = vld [vmem:[%s284 + $0x48] sm:$0xf]
      %v335 = vld [vmem:[%s284 + $0x4c] sm:$0x1]
      %v336 = vld [vmem:[%s284 + $0x50] sm:$0xf]
      %v337 = vld [vmem:[%s284 + $0x54] sm:$0xf]
      %v338 = vld [vmem:[%s284 + $0x58] sm:$0xf]
      %v339 = vld [vmem:[%s284 + $0x5c] sm:$0xf]
      %v340 = vld [vmem:[%s284 + $0x60] sm:$0x1]
      %v341 = vld [vmem:[%s284 + $0x64] sm:$0xf]
      %v342 = vld [vmem:[%s284 + $0x68] sm:$0xf]
      %v343 = vld [vmem:[%s284 + $0x6c] sm:$0xf]
      %v344 = vld [vmem:[%s284 + $0x70] sm:$0xf]
      %v345 = vld [vmem:[%s284 + $0x74] sm:$0x1]
      %v346 = vld [vmem:[%s284 + $0x78] sm:$0xf]
      %v347 = vld [vmem:[%s284 + $0x7c] sm:$0xf]
      %v348 = vld [vmem:[%s284 + $0x80] sm:$0xf]
      %v349 = vld [vmem:[%s284 + $0x84] sm:$0xf]
      %v350 = vld [vmem:[%s284 + $0x88] sm:$0x1]
      %v351 = vld [vmem:[%s284 + $0x8c] sm:$0xf]
      %v352 = vld [vmem:[%s284 + $0x90] sm:$0xf]
      %v353 = vld [vmem:[%s284 + $0x94] sm:$0xf]
      %v354 = vld [vmem:[%s284 + $0x98] sm:$0xf]
      %v355 = vld [vmem:[%s284 + $0x9c] sm:$0x1]
      %v356 = vld [vmem:[%s284 + $0xa0] sm:$0xf]
      %v357 = vld [vmem:[%s284 + $0xa4] sm:$0xf]
      %v358 = vld [vmem:[%s284 + $0xa8] sm:$0xf]
      %v359 = vld [vmem:[%s284 + $0xac] sm:$0xf]
      %v360 = vld [vmem:[%s284 + $0xb0] sm:$0x1]
      %v361 = vld [vmem:[%s284 + $0xb4] sm:$0xf]
      %v362 = vld [vmem:[%s284 + $0xb8] sm:$0xf]
      %v363 = vld [vmem:[%s284 + $0xbc] sm:$0xf]
      %v364 = vld [vmem:[%s284 + $0xc0] sm:$0xf]
      %v365 = vld [vmem:[%s284 + $0xc4] sm:$0x1]
      %v366 = vld [vmem:[%s284 + $0xc8] sm:$0xf]
      %v367 = vld [vmem:[%s284 + $0xcc] sm:$0xf]
      %v368 = vld [vmem:[%s284 + $0xd0] sm:$0xf]
      %v369 = vld [vmem:[%s284 + $0xd4] sm:$0xf]
      %v370 = vld [vmem:[%s284 + $0xd8] sm:$0x1]
      %v371 = vld [vmem:[%s284 + $0xdc] sm:$0xf]
      %v372 = vld [vmem:[%s284 + $0xe0] sm:$0xf]
      %v373 = vld [vmem:[%s284 + $0xe4] sm:$0xf]
      %v374 = vld [vmem:[%s284 + $0xe8] sm:$0xf]
      %v375 = vld [vmem:[%s284 + $0xec] sm:$0x1]
      %v376 = vld [vmem:[%s284 + $0xf0] sm:$0xf]
      %v377 = vld [vmem:[%s284 + $0xf4] sm:$0xf]
      %v378 = vld [vmem:[%s284 + $0xf8] sm:$0xf]
      %v379 = vld [vmem:[%s284 + $0xfc] sm:$0xf]
      %v380 = vld [vmem:[%s284 + $0x100] sm:$0x1]
      %v381 = vld [vmem:[%s284 + $0x104] sm:$0xf]
      %v382 = vld [vmem:[%s284 + $0x108] sm:$0xf]
      %v383 = vld [vmem:[%s284 + $0x10c] sm:$0xf]
      %v384 = vld [vmem:[%s284 + $0x110] sm:$0xf]
      %v385 = vld [vmem:[%s284 + $0x114] sm:$0x1]
      %v386 = vld [vmem:[%s284 + $0x118] sm:$0xf]
      %v387 = vld [vmem:[%s284 + $0x11c] sm:$0xf]
      %v388 = vld [vmem:[%s284 + $0x120] sm:$0xf]
      %v389 = vld [vmem:[%s284 + $0x124] sm:$0xf]
      %v390 = vld [vmem:[%s284 + $0x128] sm:$0x1]
      %v391 = vld [vmem:[%s284 + $0x12c] sm:$0xf]
      %v392 = vld [vmem:[%s284 + $0x130] sm:$0xf]
      %v393 = vld [vmem:[%s284 + $0x134] sm:$0xf]
      %v394 = vld [vmem:[%s284 + $0x138] sm:$0xf]
      %v395 = vld [vmem:[%s284 + $0x13c] sm:$0x1]
      %v396 = vld [vmem:[%s301] sm:$0xf]
      %v397 = vld [vmem:[%s301 + $0x4] sm:$0xf]
      %v398 = vld [vmem:[%s301 + $0x8] sm:$0xf]
      %v399 = vld [vmem:[%s301 + $0xc] sm:$0xf]
      %v400 = vld [vmem:[%s301 + $0x10] sm:$0x1]
      %v465 = vunpack.c.l.b16 %v316
      %v466 = vunpack.c.l.b16 %v317
      %v467 = vunpack.c.l.b16 %v318
      %v468 = vunpack.c.l.b16 %v319
      %v469 = vunpack.c.l.b16 %v321
      %v470 = vunpack.c.l.b16 %v322
      %v471 = vunpack.c.l.b16 %v323
      %v472 = vunpack.c.l.b16 %v324
      %v473 = vunpack.c.l.b16 %v326
      %v474 = vunpack.c.l.b16 %v327
      %v475 = vunpack.c.l.b16 %v328
      %v476 = vunpack.c.l.b16 %v329
      %v477 = vunpack.c.l.b16 %v331
      %v478 = vunpack.c.l.b16 %v332
      %v479 = vunpack.c.l.b16 %v333
      %v480 = vunpack.c.l.b16 %v334
      %v481 = vunpack.c.l.b16 %v336
      %v482 = vunpack.c.l.b16 %v337
      %v483 = vunpack.c.l.b16 %v338
      %v484 = vunpack.c.l.b16 %v339
      %v485 = vunpack.c.l.b16 %v341
      %v486 = vunpack.c.l.b16 %v342
      %v487 = vunpack.c.l.b16 %v343
      %v488 = vunpack.c.l.b16 %v344
      %v489 = vunpack.c.l.b16 %v346
      %v490 = vunpack.c.l.b16 %v347
      %v491 = vunpack.c.l.b16 %v348
      %v492 = vunpack.c.l.b16 %v349
      %v493 = vunpack.c.l.b16 %v351
      %v494 = vunpack.c.l.b16 %v352
      %v495 = vunpack.c.l.b16 %v353
      %v496 = vunpack.c.l.b16 %v354
      %v497 = vunpack.c.l.b16 %v356
      %v498 = vunpack.c.l.b16 %v357
      %v499 = vunpack.c.l.b16 %v358
      %v500 = vunpack.c.l.b16 %v359
      %v501 = vunpack.c.l.b16 %v361
      %v502 = vunpack.c.l.b16 %v362
      %v503 = vunpack.c.l.b16 %v363
      %v504 = vunpack.c.l.b16 %v364
      %v505 = vunpack.c.l.b16 %v366
      %v506 = vunpack.c.l.b16 %v367
      %v507 = vunpack.c.l.b16 %v368
      %v508 = vunpack.c.l.b16 %v369
      %v509 = vunpack.c.l.b16 %v371
      %v510 = vunpack.c.l.b16 %v372
      %v511 = vunpack.c.l.b16 %v373
      %v512 = vunpack.c.l.b16 %v374
      %v513 = vunpack.c.l.b16 %v376
      %v514 = vunpack.c.l.b16 %v377
      %v515 = vunpack.c.l.b16 %v378
      %v516 = vunpack.c.l.b16 %v379
      %v517 = vunpack.c.l.b16 %v381
      %v518 = vunpack.c.l.b16 %v382
      %v519 = vunpack.c.l.b16 %v383
      %v520 = vunpack.c.l.b16 %v384
      %v521 = vunpack.c.l.b16 %v386
      %v522 = vunpack.c.l.b16 %v387
      %v523 = vunpack.c.l.b16 %v388
      %v524 = vunpack.c.l.b16 %v389
      %v525 = vunpack.c.l.b16 %v391
      %v526 = vunpack.c.l.b16 %v392
      %v527 = vunpack.c.l.b16 %v393
      %v528 = vunpack.c.l.b16 %v394
      %v529 = vpack.c.b16 %v466, %v465
      %v530 = vpack.c.b16 %v468, %v467
      %v531 = vpack.c.b16 %v470, %v469
      %v532 = vpack.c.b16 %v472, %v471
      %v533 = vpack.c.b16 %v474, %v473
      %v534 = vpack.c.b16 %v476, %v475
      %v535 = vpack.c.b16 %v478, %v477
      %v536 = vpack.c.b16 %v480, %v479
      %v537 = vpack.c.b16 %v482, %v481
      %v538 = vpack.c.b16 %v484, %v483
      %v539 = vpack.c.b16 %v486, %v485
      %v540 = vpack.c.b16 %v488, %v487
      %v541 = vpack.c.b16 %v490, %v489
      %v542 = vpack.c.b16 %v492, %v491
      %v543 = vpack.c.b16 %v494, %v493
      %v544 = vpack.c.b16 %v496, %v495
      %v545 = vpack.c.b16 %v498, %v497
      %v546 = vpack.c.b16 %v500, %v499
      %v547 = vpack.c.b16 %v502, %v501
      %v548 = vpack.c.b16 %v504, %v503
      %v549 = vpack.c.b16 %v506, %v505
      %v550 = vpack.c.b16 %v508, %v507
      %v551 = vpack.c.b16 %v510, %v509
      %v552 = vpack.c.b16 %v512, %v511
      %v553 = vpack.c.b16 %v514, %v513
      %v554 = vpack.c.b16 %v516, %v515
      %v555 = vpack.c.b16 %v518, %v517
      %v556 = vpack.c.b16 %v520, %v519
      %v557 = vpack.c.b16 %v522, %v521
      %v558 = vpack.c.b16 %v524, %v523
      %v559 = vpack.c.b16 %v526, %v525
      %v560 = vpack.c.b16 %v528, %v527
      %v577 = vunpack.c.l.b16 %v320
      %v578 = vunpack.c.l.b16 %v325
      %v579 = vunpack.c.l.b16 %v330
      %v580 = vunpack.c.l.b16 %v335
      %v581 = vunpack.c.l.b16 %v340
      %v582 = vunpack.c.l.b16 %v345
      %v583 = vunpack.c.l.b16 %v350
      %v584 = vunpack.c.l.b16 %v355
      %v585 = vunpack.c.l.b16 %v360
      %v586 = vunpack.c.l.b16 %v365
      %v587 = vunpack.c.l.b16 %v370
      %v588 = vunpack.c.l.b16 %v375
      %v589 = vunpack.c.l.b16 %v380
      %v590 = vunpack.c.l.b16 %v385
      %v591 = vunpack.c.l.b16 %v390
      %v592 = vunpack.c.l.b16 %v395
      %v593 = vpack.c.b16 %v577, %v577
      %v594 = vpack.c.b16 %v578, %v578
      %v595 = vpack.c.b16 %v579, %v579
      %v596 = vpack.c.b16 %v580, %v580
      %v597 = vpack.c.b16 %v581, %v581
      %v598 = vpack.c.b16 %v582, %v582
      %v599 = vpack.c.b16 %v583, %v583
      %v600 = vpack.c.b16 %v584, %v584
      %v601 = vpack.c.b16 %v585, %v585
      %v602 = vpack.c.b16 %v586, %v586
      %v603 = vpack.c.b16 %v587, %v587
      %v604 = vpack.c.b16 %v588, %v588
      %v605 = vpack.c.b16 %v589, %v589
      %v606 = vpack.c.b16 %v590, %v590
      %v607 = vpack.c.b16 %v591, %v591
      %v608 = vpack.c.b16 %v592, %v592
      %vm609 = vsmask.f32 7424
      %v611 = vshrl.u32 %v529, 16
      %v613 = vshll.u32 %v529, 16
      %v615 = vrot.slane %v613, 1
      %v616 = vor.u32 %v611, %v615
      %v618 = vshll.u32 %v530, 16
      %v620 = vrot.slane %v618, 1
      %v621 = vsel %vm609, %v616, %v620
      %v622 = vshrl.u32 %v530, 16
      %v624 = vor.u32 %v622, %v620
      %v626 = vshll.u32 %v593, 16
      %v628 = vrot.slane %v626, 1
      %v629 = vsel %vm609, %v624, %v628
      %v631 = vshrl.u32 %v531, 16
      %v633 = vshll.u32 %v531, 16
      %v635 = vrot.slane %v633, 1
      %v636 = vor.u32 %v631, %v635
      %v638 = vshll.u32 %v532, 16
      %v640 = vrot.slane %v638, 1
      %v641 = vsel %vm609, %v636, %v640
      %v642 = vshrl.u32 %v532, 16
      %v644 = vor.u32 %v642, %v640
      %v646 = vshll.u32 %v594, 16
      %v648 = vrot.slane %v646, 1
      %v649 = vsel %vm609, %v644, %v648
      %v651 = vshrl.u32 %v533, 16
      %v653 = vshll.u32 %v533, 16
      %v655 = vrot.slane %v653, 1
      %v656 = vor.u32 %v651, %v655
      %v658 = vshll.u32 %v534, 16
      %v660 = vrot.slane %v658, 1
      %v661 = vsel %vm609, %v656, %v660
      %v662 = vshrl.u32 %v534, 16
      %v664 = vor.u32 %v662, %v660
      %v666 = vshll.u32 %v595, 16
      %v668 = vrot.slane %v666, 1
      %v669 = vsel %vm609, %v664, %v668
      %v671 = vshrl.u32 %v535, 16
      %v673 = vshll.u32 %v535, 16
      %v675 = vrot.slane %v673, 1
      %v676 = vor.u32 %v671, %v675
      %v678 = vshll.u32 %v536, 16
      %v680 = vrot.slane %v678, 1
      %v681 = vsel %vm609, %v676, %v680
      %v682 = vshrl.u32 %v536, 16
      %v684 = vor.u32 %v682, %v680
      %v686 = vshll.u32 %v596, 16
      %v688 = vrot.slane %v686, 1
      %v689 = vsel %vm609, %v684, %v688
      %v691 = vshrl.u32 %v537, 16
      %v693 = vshll.u32 %v537, 16
      %v695 = vrot.slane %v693, 1
      %v696 = vor.u32 %v691, %v695
      %v698 = vshll.u32 %v538, 16
      %v700 = vrot.slane %v698, 1
      %v701 = vsel %vm609, %v696, %v700
      %v702 = vshrl.u32 %v538, 16
      %v704 = vor.u32 %v702, %v700
      %v706 = vshll.u32 %v597, 16
      %v708 = vrot.slane %v706, 1
      %v709 = vsel %vm609, %v704, %v708
      %v711 = vshrl.u32 %v539, 16
      %v713 = vshll.u32 %v539, 16
      %v715 = vrot.slane %v713, 1
      %v716 = vor.u32 %v711, %v715
      %v718 = vshll.u32 %v540, 16
      %v720 = vrot.slane %v718, 1
      %v721 = vsel %vm609, %v716, %v720
      %v722 = vshrl.u32 %v540, 16
      %v724 = vor.u32 %v722, %v720
      %v726 = vshll.u32 %v598, 16
      %v728 = vrot.slane %v726, 1
      %v729 = vsel %vm609, %v724, %v728
      %v731 = vshrl.u32 %v541, 16
      %v733 = vshll.u32 %v541, 16
      %v735 = vrot.slane %v733, 1
      %v736 = vor.u32 %v731, %v735
      %v738 = vshll.u32 %v542, 16
      %v740 = vrot.slane %v738, 1
      %v741 = vsel %vm609, %v736, %v740
      %v742 = vshrl.u32 %v542, 16
      %v744 = vor.u32 %v742, %v740
      %v746 = vshll.u32 %v599, 16
      %v748 = vrot.slane %v746, 1
      %v749 = vsel %vm609, %v744, %v748
      %v751 = vshrl.u32 %v543, 16
      %v753 = vshll.u32 %v543, 16
      %v755 = vrot.slane %v753, 1
      %v756 = vor.u32 %v751, %v755
      %v758 = vshll.u32 %v544, 16
      %v760 = vrot.slane %v758, 1
      %v761 = vsel %vm609, %v756, %v760
      %v762 = vshrl.u32 %v544, 16
      %v764 = vor.u32 %v762, %v760
      %v766 = vshll.u32 %v600, 16
      %v768 = vrot.slane %v766, 1
      %v769 = vsel %vm609, %v764, %v768
      %v771 = vshrl.u32 %v545, 16
      %v773 = vshll.u32 %v545, 16
      %v775 = vrot.slane %v773, 1
      %v776 = vor.u32 %v771, %v775
      %v778 = vshll.u32 %v546, 16
      %v780 = vrot.slane %v778, 1
      %v781 = vsel %vm609, %v776, %v780
      %v782 = vshrl.u32 %v546, 16
      %v784 = vor.u32 %v782, %v780
      %v786 = vshll.u32 %v601, 16
      %v788 = vrot.slane %v786, 1
      %v789 = vsel %vm609, %v784, %v788
      %v791 = vshrl.u32 %v547, 16
      %v793 = vshll.u32 %v547, 16
      %v795 = vrot.slane %v793, 1
      %v796 = vor.u32 %v791, %v795
      %v798 = vshll.u32 %v548, 16
      %v800 = vrot.slane %v798, 1
      %v801 = vsel %vm609, %v796, %v800
      %v802 = vshrl.u32 %v548, 16
      %v804 = vor.u32 %v802, %v800
      %v806 = vshll.u32 %v602, 16
      %v808 = vrot.slane %v806, 1
      %v809 = vsel %vm609, %v804, %v808
      %v811 = vshrl.u32 %v549, 16
      %v813 = vshll.u32 %v549, 16
      %v815 = vrot.slane %v813, 1
      %v816 = vor.u32 %v811, %v815
      %v818 = vshll.u32 %v550, 16
      %v820 = vrot.slane %v818, 1
      %v821 = vsel %vm609, %v816, %v820
      %v822 = vshrl.u32 %v550, 16
      %v824 = vor.u32 %v822, %v820
      %v826 = vshll.u32 %v603, 16
      %v828 = vrot.slane %v826, 1
      %v829 = vsel %vm609, %v824, %v828
      %v831 = vshrl.u32 %v551, 16
      %v833 = vshll.u32 %v551, 16
      %v835 = vrot.slane %v833, 1
      %v836 = vor.u32 %v831, %v835
      %v838 = vshll.u32 %v552, 16
      %v840 = vrot.slane %v838, 1
      %v841 = vsel %vm609, %v836, %v840
      %v842 = vshrl.u32 %v552, 16
      %v844 = vor.u32 %v842, %v840
      %v846 = vshll.u32 %v604, 16
      %v848 = vrot.slane %v846, 1
      %v849 = vsel %vm609, %v844, %v848
      %v851 = vshrl.u32 %v553, 16
      %v853 = vshll.u32 %v553, 16
      %v855 = vrot.slane %v853, 1
      %v856 = vor.u32 %v851, %v855
      %v858 = vshll.u32 %v554, 16
      %v860 = vrot.slane %v858, 1
      %v861 = vsel %vm609, %v856, %v860
      %v862 = vshrl.u32 %v554, 16
      %v864 = vor.u32 %v862, %v860
      %v866 = vshll.u32 %v605, 16
      %v868 = vrot.slane %v866, 1
      %v869 = vsel %vm609, %v864, %v868
      %v871 = vshrl.u32 %v555, 16
      %v873 = vshll.u32 %v555, 16
      %v875 = vrot.slane %v873, 1
      %v876 = vor.u32 %v871, %v875
      %v878 = vshll.u32 %v556, 16
      %v880 = vrot.slane %v878, 1
      %v881 = vsel %vm609, %v876, %v880
      %v882 = vshrl.u32 %v556, 16
      %v884 = vor.u32 %v882, %v880
      %v886 = vshll.u32 %v606, 16
      %v888 = vrot.slane %v886, 1
      %v889 = vsel %vm609, %v884, %v888
      %v891 = vshrl.u32 %v557, 16
      %v893 = vshll.u32 %v557, 16
      %v895 = vrot.slane %v893, 1
      %v896 = vor.u32 %v891, %v895
      %v898 = vshll.u32 %v558, 16
      %v900 = vrot.slane %v898, 1
      %v901 = vsel %vm609, %v896, %v900
      %v902 = vshrl.u32 %v558, 16
      %v904 = vor.u32 %v902, %v900
      %v906 = vshll.u32 %v607, 16
      %v908 = vrot.slane %v906, 1
      %v909 = vsel %vm609, %v904, %v908
      %v911 = vshrl.u32 %v559, 16
      %v913 = vshll.u32 %v559, 16
      %v915 = vrot.slane %v913, 1
      %v916 = vor.u32 %v911, %v915
      %v918 = vshll.u32 %v560, 16
      %v920 = vrot.slane %v918, 1
      %v921 = vsel %vm609, %v916, %v920
      %v922 = vshrl.u32 %v560, 16
      %v924 = vor.u32 %v922, %v920
      %v926 = vshll.u32 %v608, 16
      %v928 = vrot.slane %v926, 1
      %v929 = vsel %vm609, %v924, %v928
      %930 = vrot.lane.b32.xlu0 %v621, 44
      %v931 = vpop.permute.xlu0 %930
      %932 = vrot.lane.b32.xlu0 %v629, 44
      %v933 = vpop.permute.xlu0 %932
      %934 = vrot.lane.b32.xlu0 %v641, 44
      %v935 = vpop.permute.xlu0 %934
      %936 = vrot.lane.b32.xlu0 %v649, 44
      %v937 = vpop.permute.xlu0 %936
      %938 = vrot.lane.b32.xlu0 %v661, 44
      %v939 = vpop.permute.xlu0 %938
      %940 = vrot.lane.b32.xlu0 %v669, 44
      %v941 = vpop.permute.xlu0 %940
      %942 = vrot.lane.b32.xlu0 %v681, 44
      %v943 = vpop.permute.xlu0 %942
      %944 = vrot.lane.b32.xlu0 %v689, 44
      %v945 = vpop.permute.xlu0 %944
      %946 = vrot.lane.b32.xlu0 %v701, 44
      %v947 = vpop.permute.xlu0 %946
      %948 = vrot.lane.b32.xlu0 %v709, 44
      %v949 = vpop.permute.xlu0 %948
      %950 = vrot.lane.b32.xlu0 %v721, 44
      %v951 = vpop.permute.xlu0 %950
      %952 = vrot.lane.b32.xlu0 %v729, 44
      %v953 = vpop.permute.xlu0 %952
      %954 = vrot.lane.b32.xlu0 %v741, 44
      %v955 = vpop.permute.xlu0 %954
      %956 = vrot.lane.b32.xlu0 %v749, 44
      %v957 = vpop.permute.xlu0 %956
      %958 = vrot.lane.b32.xlu0 %v761, 44
      %v959 = vpop.permute.xlu0 %958
      %960 = vrot.lane.b32.xlu0 %v769, 44
      %v961 = vpop.permute.xlu0 %960
      %962 = vrot.lane.b32.xlu0 %v781, 44
      %v963 = vpop.permute.xlu0 %962
      %964 = vrot.lane.b32.xlu0 %v789, 44
      %v965 = vpop.permute.xlu0 %964
      %966 = vrot.lane.b32.xlu0 %v801, 44
      %v967 = vpop.permute.xlu0 %966
      %968 = vrot.lane.b32.xlu0 %v809, 44
      %v969 = vpop.permute.xlu0 %968
      %970 = vrot.lane.b32.xlu0 %v821, 44
      %v971 = vpop.permute.xlu0 %970
      %972 = vrot.lane.b32.xlu0 %v829, 44
      %v973 = vpop.permute.xlu0 %972
      %974 = vrot.lane.b32.xlu0 %v841, 44
      %v975 = vpop.permute.xlu0 %974
      %976 = vrot.lane.b32.xlu0 %v849, 44
      %v977 = vpop.permute.xlu0 %976
      %978 = vrot.lane.b32.xlu0 %v861, 44
      %v979 = vpop.permute.xlu0 %978
      %980 = vrot.lane.b32.xlu0 %v869, 44
      %v981 = vpop.permute.xlu0 %980
      %982 = vrot.lane.b32.xlu0 %v881, 44
      %v983 = vpop.permute.xlu0 %982
      %984 = vrot.lane.b32.xlu0 %v889, 44
      %v985 = vpop.permute.xlu0 %984
      %986 = vrot.lane.b32.xlu0 %v901, 44
      %v987 = vpop.permute.xlu0 %986
      %988 = vrot.lane.b32.xlu0 %v909, 44
      %v989 = vpop.permute.xlu0 %988
      %990 = vrot.lane.b32.xlu0 %v921, 44
      %v991 = vpop.permute.xlu0 %990
      %992 = vrot.lane.b32.xlu0 %v929, 44
      %v993 = vpop.permute.xlu0 %992
      %v998 = vunpack.c.l.b16 %v396
      %v999 = vunpack.c.l.b16 %v397
      %v1000 = vunpack.c.l.b16 %v398
      %v1001 = vunpack.c.l.b16 %v399
      %v1002 = vpack.c.b16 %v999, %v998
      %v1003 = vpack.c.b16 %v1001, %v1000
      %1004 = vrot.lane.b32.xlu0 %v531, 88
      %v1005 = vpop.permute.xlu0 %1004
      %1006 = vrot.lane.b32.xlu0 %v532, 88
      %v1007 = vpop.permute.xlu0 %1006
      %1008 = vrot.lane.b32.xlu0 %v533, 88
      %v1009 = vpop.permute.xlu0 %1008
      %1010 = vrot.lane.b32.xlu0 %v534, 88
      %v1011 = vpop.permute.xlu0 %1010
      %1012 = vrot.lane.b32.xlu0 %v535, 88
      %v1013 = vpop.permute.xlu0 %1012
      %1014 = vrot.lane.b32.xlu0 %v536, 88
      %v1015 = vpop.permute.xlu0 %1014
      %1016 = vrot.lane.b32.xlu0 %v537, 88
      %v1017 = vpop.permute.xlu0 %1016
      %1018 = vrot.lane.b32.xlu0 %v538, 88
      %v1019 = vpop.permute.xlu0 %1018
      %1020 = vrot.lane.b32.xlu0 %v539, 88
      %v1021 = vpop.permute.xlu0 %1020
      %1022 = vrot.lane.b32.xlu0 %v540, 88
      %v1023 = vpop.permute.xlu0 %1022
      %1024 = vrot.lane.b32.xlu0 %v541, 88
      %v1025 = vpop.permute.xlu0 %1024
      %1026 = vrot.lane.b32.xlu0 %v542, 88
      %v1027 = vpop.permute.xlu0 %1026
      %1028 = vrot.lane.b32.xlu0 %v543, 88
      %v1029 = vpop.permute.xlu0 %1028
      %1030 = vrot.lane.b32.xlu0 %v544, 88
      %v1031 = vpop.permute.xlu0 %1030
      %1032 = vrot.lane.b32.xlu0 %v545, 88
      %v1033 = vpop.permute.xlu0 %1032
      %1034 = vrot.lane.b32.xlu0 %v546, 88
      %v1035 = vpop.permute.xlu0 %1034
      %1036 = vrot.lane.b32.xlu0 %v547, 88
      %v1037 = vpop.permute.xlu0 %1036
      %1038 = vrot.lane.b32.xlu0 %v548, 88
      %v1039 = vpop.permute.xlu0 %1038
      %1040 = vrot.lane.b32.xlu0 %v549, 88
      %v1041 = vpop.permute.xlu0 %1040
      %1042 = vrot.lane.b32.xlu0 %v550, 88
      %v1043 = vpop.permute.xlu0 %1042
      %1044 = vrot.lane.b32.xlu0 %v551, 88
      %v1045 = vpop.permute.xlu0 %1044
      %1046 = vrot.lane.b32.xlu0 %v552, 88
      %v1047 = vpop.permute.xlu0 %1046
      %1048 = vrot.lane.b32.xlu0 %v553, 88
      %v1049 = vpop.permute.xlu0 %1048
      %1050 = vrot.lane.b32.xlu0 %v554, 88
      %v1051 = vpop.permute.xlu0 %1050
      %1052 = vrot.lane.b32.xlu0 %v555, 88
      %v1053 = vpop.permute.xlu0 %1052
      %1054 = vrot.lane.b32.xlu0 %v556, 88
      %v1055 = vpop.permute.xlu0 %1054
      %1056 = vrot.lane.b32.xlu0 %v557, 88
      %v1057 = vpop.permute.xlu0 %1056
      %1058 = vrot.lane.b32.xlu0 %v558, 88
      %v1059 = vpop.permute.xlu0 %1058
      %1060 = vrot.lane.b32.xlu0 %v559, 88
      %v1061 = vpop.permute.xlu0 %1060
      %1062 = vrot.lane.b32.xlu0 %v560, 88
      %v1063 = vpop.permute.xlu0 %1062
      %1064 = vrot.lane.b32.xlu0 %v1002, 88
      %v1065 = vpop.permute.xlu0 %1064
      %1066 = vrot.lane.b32.xlu0 %v1003, 88
      %v1067 = vpop.permute.xlu0 %1066
      %v1069 = vunpack.c.l.b16 %v400
      %v1070 = vpack.c.b16 %v1069, %v1069
      %v1072 = vshrl.u32 %v1002, 16
      %v1074 = vshll.u32 %v1002, 16
      %v1076 = vrot.slane %v1074, 1
      %v1077 = vor.u32 %v1072, %v1076
      %v1079 = vshll.u32 %v1003, 16
      %v1081 = vrot.slane %v1079, 1
      %v1082 = vsel %vm609, %v1077, %v1081
      %v1083 = vshrl.u32 %v1003, 16
      %v1085 = vor.u32 %v1083, %v1081
      %v1087 = vshll.u32 %v1070, 16
      %v1089 = vrot.slane %v1087, 1
      %v1090 = vsel %vm609, %v1085, %v1089
      %1091 = vrot.lane.b32.xlu0 %v641, 4
      %v1092 = vpop.permute.xlu0 %1091
      %1093 = vrot.lane.b32.xlu0 %v649, 4
      %v1094 = vpop.permute.xlu0 %1093
      %1095 = vrot.lane.b32.xlu0 %v661, 4
      %v1096 = vpop.permute.xlu0 %1095
      %1097 = vrot.lane.b32.xlu0 %v669, 4
      %v1098 = vpop.permute.xlu0 %1097
      %1099 = vrot.lane.b32.xlu0 %v681, 4
      %v1100 = vpop.permute.xlu0 %1099
      %1101 = vrot.lane.b32.xlu0 %v689, 4
      %v1102 = vpop.permute.xlu0 %1101
      %1103 = vrot.lane.b32.xlu0 %v701, 4
      %v1104 = vpop.permute.xlu0 %1103
      %1105 = vrot.lane.b32.xlu0 %v709, 4
      %v1106 = vpop.permute.xlu0 %1105
      %1107 = vrot.lane.b32.xlu0 %v721, 4
      %v1108 = vpop.permute.xlu0 %1107
      %1109 = vrot.lane.b32.xlu0 %v729, 4
      %v1110 = vpop.permute.xlu0 %1109
      %1111 = vrot.lane.b32.xlu0 %v741, 4
      %v1112 = vpop.permute.xlu0 %1111
      %1113 = vrot.lane.b32.xlu0 %v749, 4
      %v1114 = vpop.permute.xlu0 %1113
      %1115 = vrot.lane.b32.xlu0 %v761, 4
      %v1116 = vpop.permute.xlu0 %1115
      %1117 = vrot.lane.b32.xlu0 %v769, 4
      %v1118 = vpop.permute.xlu0 %1117
      %1119 = vrot.lane.b32.xlu0 %v781, 4
      %v1120 = vpop.permute.xlu0 %1119
      %1121 = vrot.lane.b32.xlu0 %v789, 4
      %v1122 = vpop.permute.xlu0 %1121
      %1123 = vrot.lane.b32.xlu0 %v801, 4
      %v1124 = vpop.permute.xlu0 %1123
      %1125 = vrot.lane.b32.xlu0 %v809, 4
      %v1126 = vpop.permute.xlu0 %1125
      %1127 = vrot.lane.b32.xlu0 %v821, 4
      %v1128 = vpop.permute.xlu0 %1127
      %1129 = vrot.lane.b32.xlu0 %v829, 4
      %v1130 = vpop.permute.xlu0 %1129
      %1131 = vrot.lane.b32.xlu0 %v841, 4
      %v1132 = vpop.permute.xlu0 %1131
      %1133 = vrot.lane.b32.xlu0 %v849, 4
      %v1134 = vpop.permute.xlu0 %1133
      %1135 = vrot.lane.b32.xlu0 %v861, 4
      %v1136 = vpop.permute.xlu0 %1135
      %1137 = vrot.lane.b32.xlu0 %v869, 4
      %v1138 = vpop.permute.xlu0 %1137
      %1139 = vrot.lane.b32.xlu0 %v881, 4
      %v1140 = vpop.permute.xlu0 %1139
      %1141 = vrot.lane.b32.xlu0 %v889, 4
      %v1142 = vpop.permute.xlu0 %1141
      %1143 = vrot.lane.b32.xlu0 %v901, 4
      %v1144 = vpop.permute.xlu0 %1143
      %1145 = vrot.lane.b32.xlu0 %v909, 4
      %v1146 = vpop.permute.xlu0 %1145
      %1147 = vrot.lane.b32.xlu0 %v921, 4
      %v1148 = vpop.permute.xlu0 %1147
      %1149 = vrot.lane.b32.xlu0 %v929, 4
      %v1150 = vpop.permute.xlu0 %1149
      %1151 = vrot.lane.b32.xlu0 %v1082, 4
      %v1152 = vpop.permute.xlu0 %1151
      %1153 = vrot.lane.b32.xlu0 %v1090, 4
      %v1154 = vpop.permute.xlu0 %1153
      %vm1155 = vcmask 359424
      %v1157 = vsel %vm1155, %v529, %v931
      %v1159 = vsel %vm1155, %v530, %v933
      %v1161 = vsel %vm1155, %v531, %v935
      %v1163 = vsel %vm1155, %v532, %v937
      %v1165 = vsel %vm1155, %v533, %v939
      %v1167 = vsel %vm1155, %v534, %v941
      %v1169 = vsel %vm1155, %v535, %v943
      %v1171 = vsel %vm1155, %v536, %v945
      %v1173 = vsel %vm1155, %v537, %v947
      %v1175 = vsel %vm1155, %v538, %v949
      %v1177 = vsel %vm1155, %v539, %v951
      %v1179 = vsel %vm1155, %v540, %v953
      %v1181 = vsel %vm1155, %v541, %v955
      %v1183 = vsel %vm1155, %v542, %v957
      %v1185 = vsel %vm1155, %v543, %v959
      %v1187 = vsel %vm1155, %v544, %v961
      %v1189 = vsel %vm1155, %v545, %v963
      %v1191 = vsel %vm1155, %v546, %v965
      %v1193 = vsel %vm1155, %v547, %v967
      %v1195 = vsel %vm1155, %v548, %v969
      %v1197 = vsel %vm1155, %v549, %v971
      %v1199 = vsel %vm1155, %v550, %v973
      %v1201 = vsel %vm1155, %v551, %v975
      %v1203 = vsel %vm1155, %v552, %v977
      %v1205 = vsel %vm1155, %v553, %v979
      %v1207 = vsel %vm1155, %v554, %v981
      %v1209 = vsel %vm1155, %v555, %v983
      %v1211 = vsel %vm1155, %v556, %v985
      %v1213 = vsel %vm1155, %v557, %v987
      %v1215 = vsel %vm1155, %v558, %v989
      %v1217 = vsel %vm1155, %v559, %v991
      %v1219 = vsel %vm1155, %v560, %v993
      %vm1220 = vcmask 719872
      %v1222 = vsel %vm1220, %v1157, %v1005
      %v1225 = vsel %vm1220, %v1159, %v1007
      %v1228 = vsel %vm1220, %v1161, %v1009
      %v1231 = vsel %vm1220, %v1163, %v1011
      %v1234 = vsel %vm1220, %v1165, %v1013
      %v1237 = vsel %vm1220, %v1167, %v1015
      %v1240 = vsel %vm1220, %v1169, %v1017
      %v1243 = vsel %vm1220, %v1171, %v1019
      %v1246 = vsel %vm1220, %v1173, %v1021
      %v1249 = vsel %vm1220, %v1175, %v1023
      %v1252 = vsel %vm1220, %v1177, %v1025
      %v1255 = vsel %vm1220, %v1179, %v1027
      %v1258 = vsel %vm1220, %v1181, %v1029
      %v1261 = vsel %vm1220, %v1183, %v1031
      %v1264 = vsel %vm1220, %v1185, %v1033
      %v1267 = vsel %vm1220, %v1187, %v1035
      %v1270 = vsel %vm1220, %v1189, %v1037
      %v1273 = vsel %vm1220, %v1191, %v1039
      %v1276 = vsel %vm1220, %v1193, %v1041
      %v1279 = vsel %vm1220, %v1195, %v1043
      %v1282 = vsel %vm1220, %v1197, %v1045
      %v1285 = vsel %vm1220, %v1199, %v1047
      %v1288 = vsel %vm1220, %v1201, %v1049
      %v1291 = vsel %vm1220, %v1203, %v1051
      %v1294 = vsel %vm1220, %v1205, %v1053
      %v1297 = vsel %vm1220, %v1207, %v1055
      %v1300 = vsel %vm1220, %v1209, %v1057
      %v1303 = vsel %vm1220, %v1211, %v1059
      %v1306 = vsel %vm1220, %v1213, %v1061
      %v1309 = vsel %vm1220, %v1215, %v1063
      %v1312 = vsel %vm1220, %v1217, %v1065
      %v1315 = vsel %vm1220, %v1219, %v1067
      %vm1317 = vcmask 31744
      %v1319 = vsel %vm1317, %v1005, %v1092
      %v1321 = vsel %vm1317, %v1007, %v1094
      %v1323 = vsel %vm1317, %v1009, %v1096
      %v1325 = vsel %vm1317, %v1011, %v1098
      %v1327 = vsel %vm1317, %v1013, %v1100
      %v1329 = vsel %vm1317, %v1015, %v1102
      %v1331 = vsel %vm1317, %v1017, %v1104
      %v1333 = vsel %vm1317, %v1019, %v1106
      %v1335 = vsel %vm1317, %v1021, %v1108
      %v1337 = vsel %vm1317, %v1023, %v1110
      %v1339 = vsel %vm1317, %v1025, %v1112
      %v1341 = vsel %vm1317, %v1027, %v1114
      %v1343 = vsel %vm1317, %v1029, %v1116
      %v1345 = vsel %vm1317, %v1031, %v1118
      %v1347 = vsel %vm1317, %v1033, %v1120
      %v1349 = vsel %vm1317, %v1035, %v1122
      %v1351 = vsel %vm1317, %v1037, %v1124
      %v1353 = vsel %vm1317, %v1039, %v1126
      %v1355 = vsel %vm1317, %v1041, %v1128
      %v1357 = vsel %vm1317, %v1043, %v1130
      %v1359 = vsel %vm1317, %v1045, %v1132
      %v1361 = vsel %vm1317, %v1047, %v1134
      %v1363 = vsel %vm1317, %v1049, %v1136
      %v1365 = vsel %vm1317, %v1051, %v1138
      %v1367 = vsel %vm1317, %v1053, %v1140
      %v1369 = vsel %vm1317, %v1055, %v1142
      %v1371 = vsel %vm1317, %v1057, %v1144
      %v1373 = vsel %vm1317, %v1059, %v1146
      %v1375 = vsel %vm1317, %v1061, %v1148
      %v1377 = vsel %vm1317, %v1063, %v1150
      %v1379 = vsel %vm1317, %v1065, %v1152
      %v1381 = vsel %vm1317, %v1067, %v1154
      %v1382 = vld [vmem:[%s2] sm:$0xf]
      %v1383 = vld [vmem:[%s2 + $0x4] sm:$0xf]
      %v1384 = vld [vmem:[%s2 + $0x8] sm:$0xf]
      %v1385 = vld [vmem:[%s2 + $0xc] sm:$0xf]
      %v1386 = vld [vmem:[%s2 + $0x10] sm:$0xf]
      %v1387 = vld [vmem:[%s2 + $0x14] sm:$0xf]
      %v1388 = vld [vmem:[%s2 + $0x18] sm:$0xf]
      %v1389 = vld [vmem:[%s2 + $0x1c] sm:$0xf]
      %v1390 = vld [vmem:[%s2 + $0x20] sm:$0xf]
      %v1391 = vld [vmem:[%s2 + $0x24] sm:$0xf]
      %v1392 = vld [vmem:[%s2 + $0x28] sm:$0xf]
      %v1393 = vld [vmem:[%s2 + $0x2c] sm:$0xf]
      %v1394 = vld [vmem:[%s2 + $0x30] sm:$0xf]
      %v1395 = vld [vmem:[%s2 + $0x34] sm:$0xf]
      %v1396 = vld [vmem:[%s2 + $0x38] sm:$0xf]
      %v1397 = vld [vmem:[%s2 + $0x3c] sm:$0xf]
      %v1398 = vld [vmem:[%s2 + $0x40] sm:$0xf]
      %v1399 = vld [vmem:[%s2 + $0x44] sm:$0xf]
      %v1400 = vld [vmem:[%s2 + $0x48] sm:$0xf]
      %v1401 = vld [vmem:[%s2 + $0x4c] sm:$0xf]
      %v1402 = vld [vmem:[%s2 + $0x50] sm:$0xf]
      %v1403 = vld [vmem:[%s2 + $0x54] sm:$0xf]
      %v1404 = vld [vmem:[%s3] sm:$0x1]
      %v1406 = vperm.slane %v1404, 0
      %v1430 = vunpack.c.l.b16 %v1382
      %v1431 = vunpack.c.l.b16 %v1383
      %v1432 = vunpack.c.l.b16 %v1384
      %v1433 = vunpack.c.l.b16 %v1385
      %v1434 = vunpack.c.l.b16 %v1386
      %v1435 = vunpack.c.l.b16 %v1387
      %v1436 = vunpack.c.l.b16 %v1388
      %v1437 = vunpack.c.l.b16 %v1389
      %v1438 = vunpack.c.l.b16 %v1390
      %v1439 = vunpack.c.l.b16 %v1391
      %v1440 = vunpack.c.l.b16 %v1392
      %v1441 = vunpack.c.l.b16 %v1393
      %v1442 = vunpack.c.l.b16 %v1394
      %v1443 = vunpack.c.l.b16 %v1395
      %v1444 = vunpack.c.l.b16 %v1396
      %v1445 = vunpack.c.l.b16 %v1397
      %v1446 = vunpack.c.l.b16 %v1398
      %v1447 = vunpack.c.l.b16 %v1399
      %v1448 = vunpack.c.l.b16 %v1400
      %v1449 = vunpack.c.l.b16 %v1401
      %v1450 = vunpack.c.l.b16 %v1402
      %v1451 = vunpack.c.l.b16 %v1403
      %v1452 = vpack.c.b16 %v1431, %v1430
      %v1453 = vpack.c.b16 %v1433, %v1432
      %v1454 = vpack.c.b16 %v1435, %v1434
      %v1455 = vpack.c.b16 %v1437, %v1436
      %v1456 = vpack.c.b16 %v1439, %v1438
      %v1457 = vpack.c.b16 %v1441, %v1440
      %v1458 = vpack.c.b16 %v1443, %v1442
      %v1459 = vpack.c.b16 %v1445, %v1444
      %v1460 = vpack.c.b16 %v1447, %v1446
      %v1461 = vpack.c.b16 %v1449, %v1448
      %v1462 = vpack.c.b16 %v1451, %v1450
      %vm1474 = vcmask 392192
      %v1475 = vsel %vm1474, %v1319, 0
      %v1477 = vsel %vm1474, %v1321, 0
      %v1479 = vsel %vm1474, %v1323, 0
      %v1481 = vsel %vm1474, %v1325, 0
      %v1483 = vsel %vm1474, %v1327, 0
      %v1485 = vsel %vm1474, %v1329, 0
      %v1487 = vsel %vm1474, %v1331, 0
      %v1489 = vsel %vm1474, %v1333, 0
      %v1491 = vsel %vm1474, %v1335, 0
      %v1493 = vsel %vm1474, %v1337, 0
      %v1495 = vsel %vm1474, %v1339, 0
      %v1497 = vsel %vm1474, %v1341, 0
      %v1499 = vsel %vm1474, %v1343, 0
      %v1501 = vsel %vm1474, %v1345, 0
      %v1503 = vsel %vm1474, %v1347, 0
      %v1505 = vsel %vm1474, %v1349, 0
      %v1507 = vsel %vm1474, %v1351, 0
      %v1509 = vsel %vm1474, %v1353, 0
      %v1511 = vsel %vm1474, %v1355, 0
      %v1513 = vsel %vm1474, %v1357, 0
      %v1515 = vsel %vm1474, %v1359, 0
      %v1517 = vsel %vm1474, %v1361, 0
      %v1519 = vsel %vm1474, %v1363, 0
      %v1521 = vsel %vm1474, %v1365, 0
      %v1523 = vsel %vm1474, %v1367, 0
      %v1525 = vsel %vm1474, %v1369, 0
      %v1527 = vsel %vm1474, %v1371, 0
      %v1529 = vsel %vm1474, %v1373, 0
      %v1531 = vsel %vm1474, %v1375, 0
      %v1533 = vsel %vm1474, %v1377, 0
      %v1535 = vsel %vm1474, %v1379, 0
      %v1537 = vsel %vm1474, %v1381, 0
      %1539 = vmatpush.bf16.msra.mxu0 %v1459
      %1540 = vmatpush.bf16.msra.mxu0 %v1458
      %1541 = vmatpush.bf16.msra.mxu0 %v1457
      %1542 = vmatpush.bf16.msra.mxu0 %v1456
      %1543 = vmatpush.bf16.msra.mxu0 %v1455
      %1544 = vmatpush.bf16.msra.mxu0 %v1454
      %1545 = vmatpush.bf16.msra.mxu0 %v1453
      %1546 = vmatpush.bf16.msra.mxu0 %v1452
      %1547 = vmatmul.bf16.gmra.mxu0 %v1222
      %v1548 = vpop.f32.mrf.mxu0
      %v1549 = vadd.f32 %v1406, %v1548
      %v1550 = vpop.f32.mrf.mxu0
      %v1551 = vadd.f32 %v1406, %v1550
      %1552 = vmatmul.bf16.gmra.mxu0 %v1225
      %v1553 = vpop.f32.mrf.mxu0
      %v1554 = vadd.f32 %v1406, %v1553
      %v1555 = vpop.f32.mrf.mxu0
      %v1556 = vadd.f32 %v1406, %v1555
      %1557 = vmatmul.bf16.gmra.mxu0 %v1228
      %v1558 = vpop.f32.mrf.mxu0
      %v1559 = vadd.f32 %v1406, %v1558
      %v1560 = vpop.f32.mrf.mxu0
      %v1561 = vadd.f32 %v1406, %v1560
      %1562 = vmatmul.bf16.gmra.mxu0 %v1231
      %v1563 = vpop.f32.mrf.mxu0
      %v1564 = vadd.f32 %v1406, %v1563
      %v1565 = vpop.f32.mrf.mxu0
      %v1566 = vadd.f32 %v1406, %v1565
      %1567 = vmatmul.bf16.gmra.mxu0 %v1234
      %v1568 = vpop.f32.mrf.mxu0
      %v1569 = vadd.f32 %v1406, %v1568
      %v1570 = vpop.f32.mrf.mxu0
      %v1571 = vadd.f32 %v1406, %v1570
      %1572 = vmatmul.bf16.gmra.mxu0 %v1237
      %v1573 = vpop.f32.mrf.mxu0
      %v1574 = vadd.f32 %v1406, %v1573
      %v1575 = vpop.f32.mrf.mxu0
      %v1576 = vadd.f32 %v1406, %v1575
      %1577 = vmatmul.bf16.gmra.mxu0 %v1240
      %v1578 = vpop.f32.mrf.mxu0
      %v1579 = vadd.f32 %v1406, %v1578
      %v1580 = vpop.f32.mrf.mxu0
      %v1581 = vadd.f32 %v1406, %v1580
      %1582 = vmatmul.bf16.gmra.mxu0 %v1243
      %v1583 = vpop.f32.mrf.mxu0
      %v1584 = vadd.f32 %v1406, %v1583
      %v1585 = vpop.f32.mrf.mxu0
      %v1586 = vadd.f32 %v1406, %v1585
      %1587 = vmatmul.bf16.gmra.mxu0 %v1246
      %v1588 = vpop.f32.mrf.mxu0
      %v1589 = vadd.f32 %v1406, %v1588
      %v1590 = vpop.f32.mrf.mxu0
      %v1591 = vadd.f32 %v1406, %v1590
      %1592 = vmatmul.bf16.gmra.mxu0 %v1249
      %v1593 = vpop.f32.mrf.mxu0
      %v1594 = vadd.f32 %v1406, %v1593
      %v1595 = vpop.f32.mrf.mxu0
      %v1596 = vadd.f32 %v1406, %v1595
      %1597 = vmatmul.bf16.gmra.mxu0 %v1252
      %v1598 = vpop.f32.mrf.mxu0
      %v1599 = vadd.f32 %v1406, %v1598
      %v1600 = vpop.f32.mrf.mxu0
      %v1601 = vadd.f32 %v1406, %v1600
      %1602 = vmatmul.bf16.gmra.mxu0 %v1255
      %v1603 = vpop.f32.mrf.mxu0
      %v1604 = vadd.f32 %v1406, %v1603
      %v1605 = vpop.f32.mrf.mxu0
      %v1606 = vadd.f32 %v1406, %v1605
      %1607 = vmatmul.bf16.gmra.mxu0 %v1258
      %v1608 = vpop.f32.mrf.mxu0
      %v1609 = vadd.f32 %v1406, %v1608
      %v1610 = vpop.f32.mrf.mxu0
      %v1611 = vadd.f32 %v1406, %v1610
      %1612 = vmatmul.bf16.gmra.mxu0 %v1261
      %v1613 = vpop.f32.mrf.mxu0
      %v1614 = vadd.f32 %v1406, %v1613
      %v1615 = vpop.f32.mrf.mxu0
      %v1616 = vadd.f32 %v1406, %v1615
      %1617 = vmatmul.bf16.gmra.mxu0 %v1264
      %v1618 = vpop.f32.mrf.mxu0
      %v1619 = vadd.f32 %v1406, %v1618
      %v1620 = vpop.f32.mrf.mxu0
      %v1621 = vadd.f32 %v1406, %v1620
      %1622 = vmatmul.bf16.gmra.mxu0 %v1267
      %v1623 = vpop.f32.mrf.mxu0
      %v1624 = vadd.f32 %v1406, %v1623
      %v1625 = vpop.f32.mrf.mxu0
      %v1626 = vadd.f32 %v1406, %v1625
      %1627 = vmatmul.bf16.gmra.mxu0 %v1270
      %v1628 = vpop.f32.mrf.mxu0
      %v1629 = vadd.f32 %v1406, %v1628
      %v1630 = vpop.f32.mrf.mxu0
      %v1631 = vadd.f32 %v1406, %v1630
      %1632 = vmatmul.bf16.gmra.mxu0 %v1273
      %v1633 = vpop.f32.mrf.mxu0
      %v1634 = vadd.f32 %v1406, %v1633
      %v1635 = vpop.f32.mrf.mxu0
      %v1636 = vadd.f32 %v1406, %v1635
      %1637 = vmatmul.bf16.gmra.mxu0 %v1276
      %v1638 = vpop.f32.mrf.mxu0
      %v1639 = vadd.f32 %v1406, %v1638
      %v1640 = vpop.f32.mrf.mxu0
      %v1641 = vadd.f32 %v1406, %v1640
      %1642 = vmatmul.bf16.gmra.mxu0 %v1279
      %v1643 = vpop.f32.mrf.mxu0
      %v1644 = vadd.f32 %v1406, %v1643
      %v1645 = vpop.f32.mrf.mxu0
      %v1646 = vadd.f32 %v1406, %v1645
      %1647 = vmatmul.bf16.gmra.mxu0 %v1282
      %v1648 = vpop.f32.mrf.mxu0
      %v1649 = vadd.f32 %v1406, %v1648
      %v1650 = vpop.f32.mrf.mxu0
      %v1651 = vadd.f32 %v1406, %v1650
      %1652 = vmatmul.bf16.gmra.mxu0 %v1285
      %v1653 = vpop.f32.mrf.mxu0
      %v1654 = vadd.f32 %v1406, %v1653
      %v1655 = vpop.f32.mrf.mxu0
      %v1656 = vadd.f32 %v1406, %v1655
      %1657 = vmatmul.bf16.gmra.mxu0 %v1288
      %v1658 = vpop.f32.mrf.mxu0
      %v1659 = vadd.f32 %v1406, %v1658
      %v1660 = vpop.f32.mrf.mxu0
      %v1661 = vadd.f32 %v1406, %v1660
      %1662 = vmatmul.bf16.gmra.mxu0 %v1291
      %v1663 = vpop.f32.mrf.mxu0
      %v1664 = vadd.f32 %v1406, %v1663
      %v1665 = vpop.f32.mrf.mxu0
      %v1666 = vadd.f32 %v1406, %v1665
      %1667 = vmatmul.bf16.gmra.mxu0 %v1294
      %v1668 = vpop.f32.mrf.mxu0
      %v1669 = vadd.f32 %v1406, %v1668
      %v1670 = vpop.f32.mrf.mxu0
      %v1671 = vadd.f32 %v1406, %v1670
      %1672 = vmatmul.bf16.gmra.mxu0 %v1297
      %v1673 = vpop.f32.mrf.mxu0
      %v1674 = vadd.f32 %v1406, %v1673
      %v1675 = vpop.f32.mrf.mxu0
      %v1676 = vadd.f32 %v1406, %v1675
      %1677 = vmatmul.bf16.gmra.mxu0 %v1300
      %v1678 = vpop.f32.mrf.mxu0
      %v1679 = vadd.f32 %v1406, %v1678
      %v1680 = vpop.f32.mrf.mxu0
      %v1681 = vadd.f32 %v1406, %v1680
      %1682 = vmatmul.bf16.gmra.mxu0 %v1303
      %v1683 = vpop.f32.mrf.mxu0
      %v1684 = vadd.f32 %v1406, %v1683
      %v1685 = vpop.f32.mrf.mxu0
      %v1686 = vadd.f32 %v1406, %v1685
      %1687 = vmatmul.bf16.gmra.mxu0 %v1306
      %v1688 = vpop.f32.mrf.mxu0
      %v1689 = vadd.f32 %v1406, %v1688
      %v1690 = vpop.f32.mrf.mxu0
      %v1691 = vadd.f32 %v1406, %v1690
      %1692 = vmatmul.bf16.gmra.mxu0 %v1309
      %v1693 = vpop.f32.mrf.mxu0
      %v1694 = vadd.f32 %v1406, %v1693
      %v1695 = vpop.f32.mrf.mxu0
      %v1696 = vadd.f32 %v1406, %v1695
      %1697 = vmatmul.bf16.gmra.mxu0 %v1312
      %v1698 = vpop.f32.mrf.mxu0
      %v1699 = vadd.f32 %v1406, %v1698
      %v1700 = vpop.f32.mrf.mxu0
      %v1701 = vadd.f32 %v1406, %v1700
      %1702 = vmatmul.bf16.gmra.mxu0 %v1315
      %v1703 = vpop.f32.mrf.mxu0
      %v1704 = vadd.f32 %v1406, %v1703
      %v1705 = vpop.f32.mrf.mxu0
      %v1706 = vadd.f32 %v1406, %v1705
      %1707 = vdwg.mxu0
      %1708 = vmatpush.bf16.msra.mxu0 0
      %1709 = vmatpush.bf16.msra.mxu0 0
      %1710 = vmatpush.bf16.msra.mxu0 0
      %1711 = vmatpush.bf16.msra.mxu0 0
      %1712 = vmatpush.bf16.msra.mxu0 0
      %1713 = vmatpush.bf16.msra.mxu0 %v1462
      %1714 = vmatpush.bf16.msra.mxu0 %v1461
      %1715 = vmatpush.bf16.msra.mxu0 %v1460
      %1716 = vmatmul.bf16.gmra.mxu0 %v1475
      %v1717 = vpop.f32.mrf.mxu0
      %v1718 = vadd.f32 %v1549, %v1717
      %v1719 = vpop.f32.mrf.mxu0
      %v1720 = vadd.f32 %v1551, %v1719
      %1721 = vmatmul.bf16.gmra.mxu0 %v1477
      %v1722 = vpop.f32.mrf.mxu0
      %v1723 = vadd.f32 %v1554, %v1722
      %v1724 = vpop.f32.mrf.mxu0
      %v1725 = vadd.f32 %v1556, %v1724
      %1726 = vmatmul.bf16.gmra.mxu0 %v1479
      %v1727 = vpop.f32.mrf.mxu0
      %v1728 = vadd.f32 %v1559, %v1727
      %v1729 = vpop.f32.mrf.mxu0
      %v1730 = vadd.f32 %v1561, %v1729
      %1731 = vmatmul.bf16.gmra.mxu0 %v1481
      %v1732 = vpop.f32.mrf.mxu0
      %v1733 = vadd.f32 %v1564, %v1732
      %v1734 = vpop.f32.mrf.mxu0
      %v1735 = vadd.f32 %v1566, %v1734
      %1736 = vmatmul.bf16.gmra.mxu0 %v1483
      %v1737 = vpop.f32.mrf.mxu0
      %v1738 = vadd.f32 %v1569, %v1737
      %v1739 = vpop.f32.mrf.mxu0
      %v1740 = vadd.f32 %v1571, %v1739
      %1741 = vmatmul.bf16.gmra.mxu0 %v1485
      %v1742 = vpop.f32.mrf.mxu0
      %v1743 = vadd.f32 %v1574, %v1742
      %v1744 = vpop.f32.mrf.mxu0
      %v1745 = vadd.f32 %v1576, %v1744
      %1746 = vmatmul.bf16.gmra.mxu0 %v1487
      %v1747 = vpop.f32.mrf.mxu0
      %v1748 = vadd.f32 %v1579, %v1747
      %v1749 = vpop.f32.mrf.mxu0
      %v1750 = vadd.f32 %v1581, %v1749
      %1751 = vmatmul.bf16.gmra.mxu0 %v1489
      %v1752 = vpop.f32.mrf.mxu0
      %v1753 = vadd.f32 %v1584, %v1752
      %v1754 = vpop.f32.mrf.mxu0
      %v1755 = vadd.f32 %v1586, %v1754
      %1756 = vmatmul.bf16.gmra.mxu0 %v1491
      %v1757 = vpop.f32.mrf.mxu0
      %v1758 = vadd.f32 %v1589, %v1757
      %v1759 = vpop.f32.mrf.mxu0
      %v1760 = vadd.f32 %v1591, %v1759
      %1761 = vmatmul.bf16.gmra.mxu0 %v1493
      %v1762 = vpop.f32.mrf.mxu0
      %v1763 = vadd.f32 %v1594, %v1762
      %v1764 = vpop.f32.mrf.mxu0
      %v1765 = vadd.f32 %v1596, %v1764
      %1766 = vmatmul.bf16.gmra.mxu0 %v1495
      %v1767 = vpop.f32.mrf.mxu0
      %v1768 = vadd.f32 %v1599, %v1767
      %v1769 = vpop.f32.mrf.mxu0
      %v1770 = vadd.f32 %v1601, %v1769
      %1771 = vmatmul.bf16.gmra.mxu0 %v1497
      %v1772 = vpop.f32.mrf.mxu0
      %v1773 = vadd.f32 %v1604, %v1772
      %v1774 = vpop.f32.mrf.mxu0
      %v1775 = vadd.f32 %v1606, %v1774
      %1776 = vmatmul.bf16.gmra.mxu0 %v1499
      %v1777 = vpop.f32.mrf.mxu0
      %v1778 = vadd.f32 %v1609, %v1777
      %v1779 = vpop.f32.mrf.mxu0
      %v1780 = vadd.f32 %v1611, %v1779
      %1781 = vmatmul.bf16.gmra.mxu0 %v1501
      %v1782 = vpop.f32.mrf.mxu0
      %v1783 = vadd.f32 %v1614, %v1782
      %v1784 = vpop.f32.mrf.mxu0
      %v1785 = vadd.f32 %v1616, %v1784
      %1786 = vmatmul.bf16.gmra.mxu0 %v1503
      %v1787 = vpop.f32.mrf.mxu0
      %v1788 = vadd.f32 %v1619, %v1787
      %v1789 = vpop.f32.mrf.mxu0
      %v1790 = vadd.f32 %v1621, %v1789
      %1791 = vmatmul.bf16.gmra.mxu0 %v1505
      %v1792 = vpop.f32.mrf.mxu0
      %v1793 = vadd.f32 %v1624, %v1792
      %v1794 = vpop.f32.mrf.mxu0
      %v1795 = vadd.f32 %v1626, %v1794
      %1796 = vmatmul.bf16.gmra.mxu0 %v1507
      %v1797 = vpop.f32.mrf.mxu0
      %v1798 = vadd.f32 %v1629, %v1797
      %v1799 = vpop.f32.mrf.mxu0
      %v1800 = vadd.f32 %v1631, %v1799
      %1801 = vmatmul.bf16.gmra.mxu0 %v1509
      %v1802 = vpop.f32.mrf.mxu0
      %v1803 = vadd.f32 %v1634, %v1802
      %v1804 = vpop.f32.mrf.mxu0
      %v1805 = vadd.f32 %v1636, %v1804
      %1806 = vmatmul.bf16.gmra.mxu0 %v1511
      %v1807 = vpop.f32.mrf.mxu0
      %v1808 = vadd.f32 %v1639, %v1807
      %v1809 = vpop.f32.mrf.mxu0
      %v1810 = vadd.f32 %v1641, %v1809
      %1811 = vmatmul.bf16.gmra.mxu0 %v1513
      %v1812 = vpop.f32.mrf.mxu0
      %v1813 = vadd.f32 %v1644, %v1812
      %v1814 = vpop.f32.mrf.mxu0
      %v1815 = vadd.f32 %v1646, %v1814
      %1816 = vmatmul.bf16.gmra.mxu0 %v1515
      %v1817 = vpop.f32.mrf.mxu0
      %v1818 = vadd.f32 %v1649, %v1817
      %v1819 = vpop.f32.mrf.mxu0
      %v1820 = vadd.f32 %v1651, %v1819
      %1821 = vmatmul.bf16.gmra.mxu0 %v1517
      %v1822 = vpop.f32.mrf.mxu0
      %v1823 = vadd.f32 %v1654, %v1822
      %v1824 = vpop.f32.mrf.mxu0
      %v1825 = vadd.f32 %v1656, %v1824
      %1826 = vmatmul.bf16.gmra.mxu0 %v1519
      %v1827 = vpop.f32.mrf.mxu0
      %v1828 = vadd.f32 %v1659, %v1827
      %v1829 = vpop.f32.mrf.mxu0
      %v1830 = vadd.f32 %v1661, %v1829
      %1831 = vmatmul.bf16.gmra.mxu0 %v1521
      %v1832 = vpop.f32.mrf.mxu0
      %v1833 = vadd.f32 %v1664, %v1832
      %v1834 = vpop.f32.mrf.mxu0
      %v1835 = vadd.f32 %v1666, %v1834
      %1836 = vmatmul.bf16.gmra.mxu0 %v1523
      %v1837 = vpop.f32.mrf.mxu0
      %v1838 = vadd.f32 %v1669, %v1837
      %v1839 = vpop.f32.mrf.mxu0
      %v1840 = vadd.f32 %v1671, %v1839
      %1841 = vmatmul.bf16.gmra.mxu0 %v1525
      %v1842 = vpop.f32.mrf.mxu0
      %v1843 = vadd.f32 %v1674, %v1842
      %v1844 = vpop.f32.mrf.mxu0
      %v1845 = vadd.f32 %v1676, %v1844
      %1846 = vmatmul.bf16.gmra.mxu0 %v1527
      %v1847 = vpop.f32.mrf.mxu0
      %v1848 = vadd.f32 %v1679, %v1847
      %v1849 = vpop.f32.mrf.mxu0
      %v1850 = vadd.f32 %v1681, %v1849
      %1851 = vmatmul.bf16.gmra.mxu0 %v1529
      %v1852 = vpop.f32.mrf.mxu0
      %v1853 = vadd.f32 %v1684, %v1852
      %v1854 = vpop.f32.mrf.mxu0
      %v1855 = vadd.f32 %v1686, %v1854
      %1856 = vmatmul.bf16.gmra.mxu0 %v1531
      %v1857 = vpop.f32.mrf.mxu0
      %v1858 = vadd.f32 %v1689, %v1857
      %v1859 = vpop.f32.mrf.mxu0
      %v1860 = vadd.f32 %v1691, %v1859
      %1861 = vmatmul.bf16.gmra.mxu0 %v1533
      %v1862 = vpop.f32.mrf.mxu0
      %v1863 = vadd.f32 %v1694, %v1862
      %v1864 = vpop.f32.mrf.mxu0
      %v1865 = vadd.f32 %v1696, %v1864
      %1866 = vmatmul.bf16.gmra.mxu0 %v1535
      %v1867 = vpop.f32.mrf.mxu0
      %v1868 = vadd.f32 %v1699, %v1867
      %v1869 = vpop.f32.mrf.mxu0
      %v1870 = vadd.f32 %v1701, %v1869
      %1871 = vmatmul.bf16.gmra.mxu0 %v1537
      %v1872 = vpop.f32.mrf.mxu0
      %v1873 = vadd.f32 %v1704, %v1872
      %v1874 = vpop.f32.mrf.mxu0
      %v1875 = vadd.f32 %v1706, %v1874
      %1876 = vdwg.mxu0
      %vm1877 = vcmp.ge.f32.partialorder %v1718, 0.0
      %vm1878 = vcmp.ge.f32.partialorder %v1720, 0.0
      %vm1879 = vcmp.ge.f32.partialorder %v1723, 0.0
      %vm1880 = vcmp.ge.f32.partialorder %v1725, 0.0
      %vm1881 = vcmp.ge.f32.partialorder %v1728, 0.0
      %vm1882 = vcmp.ge.f32.partialorder %v1730, 0.0
      %vm1883 = vcmp.ge.f32.partialorder %v1733, 0.0
      %vm1884 = vcmp.ge.f32.partialorder %v1735, 0.0
      %vm1885 = vcmp.ge.f32.partialorder %v1738, 0.0
      %vm1886 = vcmp.ge.f32.partialorder %v1740, 0.0
      %vm1887 = vcmp.ge.f32.partialorder %v1743, 0.0
      %vm1888 = vcmp.ge.f32.partialorder %v1745, 0.0
      %vm1889 = vcmp.ge.f32.partialorder %v1748, 0.0
      %vm1890 = vcmp.ge.f32.partialorder %v1750, 0.0
      %vm1891 = vcmp.ge.f32.partialorder %v1753, 0.0
      %vm1892 = vcmp.ge.f32.partialorder %v1755, 0.0
      %vm1893 = vcmp.ge.f32.partialorder %v1758, 0.0
      %vm1894 = vcmp.ge.f32.partialorder %v1760, 0.0
      %vm1895 = vcmp.ge.f32.partialorder %v1763, 0.0
      %vm1896 = vcmp.ge.f32.partialorder %v1765, 0.0
      %vm1897 = vcmp.ge.f32.partialorder %v1768, 0.0
      %vm1898 = vcmp.ge.f32.partialorder %v1770, 0.0
      %vm1899 = vcmp.ge.f32.partialorder %v1773, 0.0
      %vm1900 = vcmp.ge.f32.partialorder %v1775, 0.0
      %vm1901 = vcmp.ge.f32.partialorder %v1778, 0.0
      %vm1902 = vcmp.ge.f32.partialorder %v1780, 0.0
      %vm1903 = vcmp.ge.f32.partialorder %v1783, 0.0
      %vm1904 = vcmp.ge.f32.partialorder %v1785, 0.0
      %vm1905 = vcmp.ge.f32.partialorder %v1788, 0.0
      %vm1906 = vcmp.ge.f32.partialorder %v1790, 0.0
      %vm1907 = vcmp.ge.f32.partialorder %v1793, 0.0
      %vm1908 = vcmp.ge.f32.partialorder %v1795, 0.0
      %vm1909 = vcmp.ge.f32.partialorder %v1798, 0.0
      %vm1910 = vcmp.ge.f32.partialorder %v1800, 0.0
      %vm1911 = vcmp.ge.f32.partialorder %v1803, 0.0
      %vm1912 = vcmp.ge.f32.partialorder %v1805, 0.0
      %vm1913 = vcmp.ge.f32.partialorder %v1808, 0.0
      %vm1914 = vcmp.ge.f32.partialorder %v1810, 0.0
      %vm1915 = vcmp.ge.f32.partialorder %v1813, 0.0
      %vm1916 = vcmp.ge.f32.partialorder %v1815, 0.0
      %vm1917 = vcmp.ge.f32.partialorder %v1818, 0.0
      %vm1918 = vcmp.ge.f32.partialorder %v1820, 0.0
      %vm1919 = vcmp.ge.f32.partialorder %v1823, 0.0
      %vm1920 = vcmp.ge.f32.partialorder %v1825, 0.0
      %vm1921 = vcmp.ge.f32.partialorder %v1828, 0.0
      %vm1922 = vcmp.ge.f32.partialorder %v1830, 0.0
      %vm1923 = vcmp.ge.f32.partialorder %v1833, 0.0
      %vm1924 = vcmp.ge.f32.partialorder %v1835, 0.0
      %vm1925 = vcmp.ge.f32.partialorder %v1838, 0.0
      %vm1926 = vcmp.ge.f32.partialorder %v1840, 0.0
      %vm1927 = vcmp.ge.f32.partialorder %v1843, 0.0
      %vm1928 = vcmp.ge.f32.partialorder %v1845, 0.0
      %vm1929 = vcmp.ge.f32.partialorder %v1848, 0.0
      %vm1930 = vcmp.ge.f32.partialorder %v1850, 0.0
      %vm1931 = vcmp.ge.f32.partialorder %v1853, 0.0
      %vm1932 = vcmp.ge.f32.partialorder %v1855, 0.0
      %vm1933 = vcmp.ge.f32.partialorder %v1858, 0.0
      %vm1934 = vcmp.ge.f32.partialorder %v1860, 0.0
      %vm1935 = vcmp.ge.f32.partialorder %v1863, 0.0
      %vm1936 = vcmp.ge.f32.partialorder %v1865, 0.0
      %vm1937 = vcmp.ge.f32.partialorder %v1868, 0.0
      %vm1938 = vcmp.ge.f32.partialorder %v1870, 0.0
      %vm1939 = vcmp.ge.f32.partialorder %v1873, 0.0
      %vm1940 = vcmp.ge.f32.partialorder %v1875, 0.0
      %v1941 = vmul.f32 %v1718, 0.2
      %v1942 = vmul.f32 %v1720, 0.2
      %v1943 = vmul.f32 %v1723, 0.2
      %v1944 = vmul.f32 %v1725, 0.2
      %v1945 = vmul.f32 %v1728, 0.2
      %v1946 = vmul.f32 %v1730, 0.2
      %v1947 = vmul.f32 %v1733, 0.2
      %v1948 = vmul.f32 %v1735, 0.2
      %v1949 = vmul.f32 %v1738, 0.2
      %v1950 = vmul.f32 %v1740, 0.2
      %v1951 = vmul.f32 %v1743, 0.2
      %v1952 = vmul.f32 %v1745, 0.2
      %v1953 = vmul.f32 %v1748, 0.2
      %v1954 = vmul.f32 %v1750, 0.2
      %v1955 = vmul.f32 %v1753, 0.2
      %v1956 = vmul.f32 %v1755, 0.2
      %v1957 = vmul.f32 %v1758, 0.2
      %v1958 = vmul.f32 %v1760, 0.2
      %v1959 = vmul.f32 %v1763, 0.2
      %v1960 = vmul.f32 %v1765, 0.2
      %v1961 = vmul.f32 %v1768, 0.2
      %v1962 = vmul.f32 %v1770, 0.2
      %v1963 = vmul.f32 %v1773, 0.2
      %v1964 = vmul.f32 %v1775, 0.2
      %v1965 = vmul.f32 %v1778, 0.2
      %v1966 = vmul.f32 %v1780, 0.2
      %v1967 = vmul.f32 %v1783, 0.2
      %v1968 = vmul.f32 %v1785, 0.2
      %v1969 = vmul.f32 %v1788, 0.2
      %v1970 = vmul.f32 %v1790, 0.2
      %v1971 = vmul.f32 %v1793, 0.2
      %v1972 = vmul.f32 %v1795, 0.2
      %v1973 = vmul.f32 %v1798, 0.2
      %v1974 = vmul.f32 %v1800, 0.2
      %v1975 = vmul.f32 %v1803, 0.2
      %v1976 = vmul.f32 %v1805, 0.2
      %v1977 = vmul.f32 %v1808, 0.2
      %v1978 = vmul.f32 %v1810, 0.2
      %v1979 = vmul.f32 %v1813, 0.2
      %v1980 = vmul.f32 %v1815, 0.2
      %v1981 = vmul.f32 %v1818, 0.2
      %v1982 = vmul.f32 %v1820, 0.2
      %v1983 = vmul.f32 %v1823, 0.2
      %v1984 = vmul.f32 %v1825, 0.2
      %v1985 = vmul.f32 %v1828, 0.2
      %v1986 = vmul.f32 %v1830, 0.2
      %v1987 = vmul.f32 %v1833, 0.2
      %v1988 = vmul.f32 %v1835, 0.2
      %v1989 = vmul.f32 %v1838, 0.2
      %v1990 = vmul.f32 %v1840, 0.2
      %v1991 = vmul.f32 %v1843, 0.2
      %v1992 = vmul.f32 %v1845, 0.2
      %v1993 = vmul.f32 %v1848, 0.2
      %v1994 = vmul.f32 %v1850, 0.2
      %v1995 = vmul.f32 %v1853, 0.2
      %v1996 = vmul.f32 %v1855, 0.2
      %v1997 = vmul.f32 %v1858, 0.2
      %v1998 = vmul.f32 %v1860, 0.2
      %v1999 = vmul.f32 %v1863, 0.2
      %v2000 = vmul.f32 %v1865, 0.2
      %v2001 = vmul.f32 %v1868, 0.2
      %v2002 = vmul.f32 %v1870, 0.2
      %v2003 = vmul.f32 %v1873, 0.2
      %v2004 = vmul.f32 %v1875, 0.2
      %v2005 = vsel %vm1877, %v1718, %v1941
      %v2006 = vsel %vm1878, %v1720, %v1942
      %v2007 = vsel %vm1879, %v1723, %v1943
      %v2008 = vsel %vm1880, %v1725, %v1944
      %v2009 = vsel %vm1881, %v1728, %v1945
      %v2010 = vsel %vm1882, %v1730, %v1946
      %v2011 = vsel %vm1883, %v1733, %v1947
      %v2012 = vsel %vm1884, %v1735, %v1948
      %v2013 = vsel %vm1885, %v1738, %v1949
      %v2014 = vsel %vm1886, %v1740, %v1950
      %v2015 = vsel %vm1887, %v1743, %v1951
      %v2016 = vsel %vm1888, %v1745, %v1952
      %v2017 = vsel %vm1889, %v1748, %v1953
      %v2018 = vsel %vm1890, %v1750, %v1954
      %v2019 = vsel %vm1891, %v1753, %v1955
      %v2020 = vsel %vm1892, %v1755, %v1956
      %v2021 = vsel %vm1893, %v1758, %v1957
      %v2022 = vsel %vm1894, %v1760, %v1958
      %v2023 = vsel %vm1895, %v1763, %v1959
      %v2024 = vsel %vm1896, %v1765, %v1960
      %v2025 = vsel %vm1897, %v1768, %v1961
      %v2026 = vsel %vm1898, %v1770, %v1962
      %v2027 = vsel %vm1899, %v1773, %v1963
      %v2028 = vsel %vm1900, %v1775, %v1964
      %v2029 = vsel %vm1901, %v1778, %v1965
      %v2030 = vsel %vm1902, %v1780, %v1966
      %v2031 = vsel %vm1903, %v1783, %v1967
      %v2032 = vsel %vm1904, %v1785, %v1968
      %v2033 = vsel %vm1905, %v1788, %v1969
      %v2034 = vsel %vm1906, %v1790, %v1970
      %v2035 = vsel %vm1907, %v1793, %v1971
      %v2036 = vsel %vm1908, %v1795, %v1972
      %v2037 = vsel %vm1909, %v1798, %v1973
      %v2038 = vsel %vm1910, %v1800, %v1974
      %v2039 = vsel %vm1911, %v1803, %v1975
      %v2040 = vsel %vm1912, %v1805, %v1976
      %v2041 = vsel %vm1913, %v1808, %v1977
      %v2042 = vsel %vm1914, %v1810, %v1978
      %v2043 = vsel %vm1915, %v1813, %v1979
      %v2044 = vsel %vm1916, %v1815, %v1980
      %v2045 = vsel %vm1917, %v1818, %v1981
      %v2046 = vsel %vm1918, %v1820, %v1982
      %v2047 = vsel %vm1919, %v1823, %v1983
      %v2048 = vsel %vm1920, %v1825, %v1984
      %v2049 = vsel %vm1921, %v1828, %v1985
      %v2050 = vsel %vm1922, %v1830, %v1986
      %v2051 = vsel %vm1923, %v1833, %v1987
      %v2052 = vsel %vm1924, %v1835, %v1988
      %v2053 = vsel %vm1925, %v1838, %v1989
      %v2054 = vsel %vm1926, %v1840, %v1990
      %v2055 = vsel %vm1927, %v1843, %v1991
      %v2056 = vsel %vm1928, %v1845, %v1992
      %v2057 = vsel %vm1929, %v1848, %v1993
      %v2058 = vsel %vm1930, %v1850, %v1994
      %v2059 = vsel %vm1931, %v1853, %v1995
      %v2060 = vsel %vm1932, %v1855, %v1996
      %v2061 = vsel %vm1933, %v1858, %v1997
      %v2062 = vsel %vm1934, %v1860, %v1998
      %v2063 = vsel %vm1935, %v1863, %v1999
      %v2064 = vsel %vm1936, %v1865, %v2000
      %v2065 = vsel %vm1937, %v1868, %v2001
      %v2066 = vsel %vm1938, %v1870, %v2002
      %v2067 = vsel %vm1939, %v1873, %v2003
      %v2068 = vsel %vm1940, %v1875, %v2004
      %v2069 = vpack.c.bf16 %v2005, %v2005
      %v2070 = vpack.c.bf16 %v2006, %v2006
      %v2071 = vpack.c.bf16 %v2007, %v2007
      %v2072 = vpack.c.bf16 %v2008, %v2008
      %v2073 = vpack.c.bf16 %v2009, %v2009
      %v2074 = vpack.c.bf16 %v2010, %v2010
      %v2075 = vpack.c.bf16 %v2011, %v2011
      %v2076 = vpack.c.bf16 %v2012, %v2012
      %v2077 = vpack.c.bf16 %v2013, %v2013
      %v2078 = vpack.c.bf16 %v2014, %v2014
      %v2079 = vpack.c.bf16 %v2015, %v2015
      %v2080 = vpack.c.bf16 %v2016, %v2016
      %v2081 = vpack.c.bf16 %v2017, %v2017
      %v2082 = vpack.c.bf16 %v2018, %v2018
      %v2083 = vpack.c.bf16 %v2019, %v2019
      %v2084 = vpack.c.bf16 %v2020, %v2020
      %v2085 = vpack.c.bf16 %v2021, %v2021
      %v2086 = vpack.c.bf16 %v2022, %v2022
      %v2087 = vpack.c.bf16 %v2023, %v2023
      %v2088 = vpack.c.bf16 %v2024, %v2024
      %v2089 = vpack.c.bf16 %v2025, %v2025
      %v2090 = vpack.c.bf16 %v2026, %v2026
      %v2091 = vpack.c.bf16 %v2027, %v2027
      %v2092 = vpack.c.bf16 %v2028, %v2028
      %v2093 = vpack.c.bf16 %v2029, %v2029
      %v2094 = vpack.c.bf16 %v2030, %v2030
      %v2095 = vpack.c.bf16 %v2031, %v2031
      %v2096 = vpack.c.bf16 %v2032, %v2032
      %v2097 = vpack.c.bf16 %v2033, %v2033
      %v2098 = vpack.c.bf16 %v2034, %v2034
      %v2099 = vpack.c.bf16 %v2035, %v2035
      %v2100 = vpack.c.bf16 %v2036, %v2036
      %v2101 = vpack.c.bf16 %v2037, %v2037
      %v2102 = vpack.c.bf16 %v2038, %v2038
      %v2103 = vpack.c.bf16 %v2039, %v2039
      %v2104 = vpack.c.bf16 %v2040, %v2040
      %v2105 = vpack.c.bf16 %v2041, %v2041
      %v2106 = vpack.c.bf16 %v2042, %v2042
      %v2107 = vpack.c.bf16 %v2043, %v2043
      %v2108 = vpack.c.bf16 %v2044, %v2044
      %v2109 = vpack.c.bf16 %v2045, %v2045
      %v2110 = vpack.c.bf16 %v2046, %v2046
      %v2111 = vpack.c.bf16 %v2047, %v2047
      %v2112 = vpack.c.bf16 %v2048, %v2048
      %v2113 = vpack.c.bf16 %v2049, %v2049
      %v2114 = vpack.c.bf16 %v2050, %v2050
      %v2115 = vpack.c.bf16 %v2051, %v2051
      %v2116 = vpack.c.bf16 %v2052, %v2052
      %v2117 = vpack.c.bf16 %v2053, %v2053
      %v2118 = vpack.c.bf16 %v2054, %v2054
      %v2119 = vpack.c.bf16 %v2055, %v2055
      %v2120 = vpack.c.bf16 %v2056, %v2056
      %v2121 = vpack.c.bf16 %v2057, %v2057
      %v2122 = vpack.c.bf16 %v2058, %v2058
      %v2123 = vpack.c.bf16 %v2059, %v2059
      %v2124 = vpack.c.bf16 %v2060, %v2060
      %v2125 = vpack.c.bf16 %v2061, %v2061
      %v2126 = vpack.c.bf16 %v2062, %v2062
      %v2127 = vpack.c.bf16 %v2063, %v2063
      %v2128 = vpack.c.bf16 %v2064, %v2064
      %v2129 = vpack.c.bf16 %v2065, %v2065
      %v2130 = vpack.c.bf16 %v2066, %v2066
      %v2131 = vpack.c.bf16 %v2067, %v2067
      %v2132 = vpack.c.bf16 %v2068, %v2068
      %vm2133 = vcmask 257024
      %2134 = vst.msk [vmem:[%s313] sm:$0xf] %vm2133, %v2069
      %2135 = vst.msk [vmem:[%s313 + $0x4] sm:$0xf] %vm2133, %v2070
      %2136 = vst.msk [vmem:[%s313 + $0x8] sm:$0xf] %vm2133, %v2071
      %2137 = vst.msk [vmem:[%s313 + $0xc] sm:$0xf] %vm2133, %v2072
      %2138 = vst.msk [vmem:[%s313 + $0x10] sm:$0xf] %vm2133, %v2073
      %2139 = vst.msk [vmem:[%s313 + $0x14] sm:$0xf] %vm2133, %v2074
      %2140 = vst.msk [vmem:[%s313 + $0x18] sm:$0xf] %vm2133, %v2075
      %2141 = vst.msk [vmem:[%s313 + $0x1c] sm:$0xf] %vm2133, %v2076
      %2142 = vst.msk [vmem:[%s313 + $0x20] sm:$0xf] %vm2133, %v2077
      %2143 = vst.msk [vmem:[%s313 + $0x24] sm:$0xf] %vm2133, %v2078
      %2144 = vst.msk [vmem:[%s313 + $0x28] sm:$0xf] %vm2133, %v2079
      %2145 = vst.msk [vmem:[%s313 + $0x2c] sm:$0xf] %vm2133, %v2080
      %2146 = vst.msk [vmem:[%s313 + $0x30] sm:$0xf] %vm2133, %v2081
      %2147 = vst.msk [vmem:[%s313 + $0x34] sm:$0xf] %vm2133, %v2082
      %2148 = vst.msk [vmem:[%s313 + $0x38] sm:$0xf] %vm2133, %v2083
      %2149 = vst.msk [vmem:[%s313 + $0x3c] sm:$0xf] %vm2133, %v2084
      %2150 = vst.msk [vmem:[%s313 + $0x40] sm:$0xf] %vm2133, %v2085
      %2151 = vst.msk [vmem:[%s313 + $0x44] sm:$0xf] %vm2133, %v2086
      %2152 = vst.msk [vmem:[%s313 + $0x48] sm:$0xf] %vm2133, %v2087
      %2153 = vst.msk [vmem:[%s313 + $0x4c] sm:$0xf] %vm2133, %v2088
      %2154 = vst.msk [vmem:[%s313 + $0x50] sm:$0xf] %vm2133, %v2089
      %2155 = vst.msk [vmem:[%s313 + $0x54] sm:$0xf] %vm2133, %v2090
      %2156 = vst.msk [vmem:[%s313 + $0x58] sm:$0xf] %vm2133, %v2091
      %2157 = vst.msk [vmem:[%s313 + $0x5c] sm:$0xf] %vm2133, %v2092
      %2158 = vst.msk [vmem:[%s313 + $0x60] sm:$0xf] %vm2133, %v2093
      %2159 = vst.msk [vmem:[%s313 + $0x64] sm:$0xf] %vm2133, %v2094
      %2160 = vst.msk [vmem:[%s313 + $0x68] sm:$0xf] %vm2133, %v2095
      %2161 = vst.msk [vmem:[%s313 + $0x6c] sm:$0xf] %vm2133, %v2096
      %2162 = vst.msk [vmem:[%s313 + $0x70] sm:$0xf] %vm2133, %v2097
      %2163 = vst.msk [vmem:[%s313 + $0x74] sm:$0xf] %vm2133, %v2098
      %2164 = vst.msk [vmem:[%s313 + $0x78] sm:$0xf] %vm2133, %v2099
      %2165 = vst.msk [vmem:[%s313 + $0x7c] sm:$0xf] %vm2133, %v2100
      %2166 = vst.msk [vmem:[%s313 + $0x80] sm:$0xf] %vm2133, %v2101
      %2167 = vst.msk [vmem:[%s313 + $0x84] sm:$0xf] %vm2133, %v2102
      %2168 = vst.msk [vmem:[%s313 + $0x88] sm:$0xf] %vm2133, %v2103
      %2169 = vst.msk [vmem:[%s313 + $0x8c] sm:$0xf] %vm2133, %v2104
      %2170 = vst.msk [vmem:[%s313 + $0x90] sm:$0xf] %vm2133, %v2105
      %2171 = vst.msk [vmem:[%s313 + $0x94] sm:$0xf] %vm2133, %v2106
      %2172 = vst.msk [vmem:[%s313 + $0x98] sm:$0xf] %vm2133, %v2107
      %2173 = vst.msk [vmem:[%s313 + $0x9c] sm:$0xf] %vm2133, %v2108
      %2174 = vst.msk [vmem:[%s313 + $0xa0] sm:$0xf] %vm2133, %v2109
      %2175 = vst.msk [vmem:[%s313 + $0xa4] sm:$0xf] %vm2133, %v2110
      %2176 = vst.msk [vmem:[%s313 + $0xa8] sm:$0xf] %vm2133, %v2111
      %2177 = vst.msk [vmem:[%s313 + $0xac] sm:$0xf] %vm2133, %v2112
      %2178 = vst.msk [vmem:[%s313 + $0xb0] sm:$0xf] %vm2133, %v2113
      %2179 = vst.msk [vmem:[%s313 + $0xb4] sm:$0xf] %vm2133, %v2114
      %2180 = vst.msk [vmem:[%s313 + $0xb8] sm:$0xf] %vm2133, %v2115
      %2181 = vst.msk [vmem:[%s313 + $0xbc] sm:$0xf] %vm2133, %v2116
      %2182 = vst.msk [vmem:[%s313 + $0xc0] sm:$0xf] %vm2133, %v2117
      %2183 = vst.msk [vmem:[%s313 + $0xc4] sm:$0xf] %vm2133, %v2118
      %2184 = vst.msk [vmem:[%s313 + $0xc8] sm:$0xf] %vm2133, %v2119
      %2185 = vst.msk [vmem:[%s313 + $0xcc] sm:$0xf] %vm2133, %v2120
      %2186 = vst.msk [vmem:[%s313 + $0xd0] sm:$0xf] %vm2133, %v2121
      %2187 = vst.msk [vmem:[%s313 + $0xd4] sm:$0xf] %vm2133, %v2122
      %2188 = vst.msk [vmem:[%s313 + $0xd8] sm:$0xf] %vm2133, %v2123
      %2189 = vst.msk [vmem:[%s313 + $0xdc] sm:$0xf] %vm2133, %v2124
      %2190 = vst.msk [vmem:[%s313 + $0xe0] sm:$0xf] %vm2133, %v2125
      %2191 = vst.msk [vmem:[%s313 + $0xe4] sm:$0xf] %vm2133, %v2126
      %2192 = vst.msk [vmem:[%s313 + $0xe8] sm:$0xf] %vm2133, %v2127
      %2193 = vst.msk [vmem:[%s313 + $0xec] sm:$0xf] %vm2133, %v2128
      %2194 = vst.msk [vmem:[%s313 + $0xf0] sm:$0xf] %vm2133, %v2129
      %2195 = vst.msk [vmem:[%s313 + $0xf4] sm:$0xf] %vm2133, %v2130
      %2196 = vst.msk [vmem:[%s313 + $0xf8] sm:$0xf] %vm2133, %v2131
      %2197 = vst.msk [vmem:[%s313 + $0xfc] sm:$0xf] %vm2133, %v2132
      %s2198 = smul.u32 16, %s20
      %p2199 = scmp.lt.s32.totalorder %s19, 1
      %s2200 = scalar_select %p2199, %s19, 1
      %p2201 = scmp.lt.s32.totalorder %s2198, 47
      %s2202 = scalar_select %p2201, %s2198, 47
      %s2203 = smul.addr %s2202, 4
      %s2204 = smul.addr %s2200, 192
      %s2205 = sadd.s32 %s2203, %s2204
      %s2206 = smul.addr %s2205, 4
      %s2207 = scalar_lea.vmem %s4, %s2206
      // Predicated region
      $region37: #{tpu_custom_call.1} parent=35 // pred_check
        %p2208 = pneg %p149
      $region38: #{tpu_custom_call.1} parent=35 // pred_check_branch
        %2210 = sbr.rel (%p2208) target = $region40
      $region39: #{tpu_custom_call.1} parent=35 // pred_region
        %s2211 = smul.u32 16, %s20
      $region40: #{tpu_custom_call.1} parent=35 // pred_fallthru
        _
    $region36: #{tpu_custom_call.1} parent=5 // pred_fallthru
      _
    %p2212 = scmp.le.s32.totalorder 2, %s10
    // Predicated region
    $region41: #{tpu_custom_call.1} parent=5 // pred_check
      %p2213 = pneg %p2212
    $region42: #{tpu_custom_call.1} parent=5 // pred_check_branch
      %2215 = sbr.rel (%p2213) target = $region44
    $region43: #{tpu_custom_call.1} parent=5 // pred_region
      %s2216 = ssub.s32 %s10, 2
      // Predicated region
      $region45: #{tpu_custom_call.1} parent=43 // pred_check
        %p2217 = pneg %p155
      $region46: #{tpu_custom_call.1} parent=43 // pred_check_branch
        %2219 = sbr.rel (%p2217) target = $region48
      $region47: #{tpu_custom_call.1} parent=43 // pred_region
        %s2220 = smul.u32 16, %s22
        %p2221 = scmp.lt.s32.totalorder %s21, 1
        %s2222 = scalar_select %p2221, %s21, 1
        %p2223 = scmp.lt.s32.totalorder %s2220, 47
        %s2224 = scalar_select %p2223, %s2220, 47
        %s2225 = smul.addr %s2224, 4
        %s2226 = smul.addr %s2222, 192
        %s2227 = sadd.s32 %s2225, %s2226
        %s2228 = smul.addr %s2227, 4
        %s2229 = scalar_lea.vmem %s4, %s2228
      $region48: #{tpu_custom_call.1} parent=43 // pred_fallthru
        _
    $region44: #{tpu_custom_call.1} parent=5 // pred_fallthru
      _
  $region6: #{tpu_custom_call.1} parent=0 // loop_footer
    %s14 = sadd.s32 1, %s10
  $region7: #{tpu_custom_call.1} parent=0 // loop_footer_branch
    %9 = sbr.rel target = $region3
  $region8: #{tpu_custom_call.1} parent=0 // loop_exit
    _

</llo_original>
